<compile_context>
chip_gen: v6e
topology: v6e:2x2x1
jax: 0.10.0
libtpu: 0.0.40
codegen_flags: <defaults>
</compile_context>

<pallas_src>
import jax
import jax.numpy as jnp
import numpy as np
from jax.experimental import pallas as pl
from jax.experimental.pallas import tpu as pltpu

# ----------------------------- config ---------------------------------------
EMBEDDING_DIM = 16
H_DIM = 32
PRED_LEN = 8
BATCH = 8
LEAKY_SLOPE = 0.01  # nn.LeakyReLU default

E2 = 2 * EMBEDDING_DIM        # 32: spatial-embedding hidden width
G = 4 * H_DIM                 # 128: LSTM gate width == slab lane width

# weight-slab row offsets (lane width = G = 128 everywhere)
_R_WFUSED = 0                 # rows [0, 64)  : [W2@Wih ; Whh]  (g-gate cols x2)
_R_WNEXT = E2 + H_DIM         # rows [64, 96) : [Wp@W1[:2] | Wp | 0]
_R_BL = _R_WNEXT + H_DIM      # 96 : (b_ih+b_hh) + b2@Wih       (g-gate cols x2)
_R_BNEXT = _R_BL + 1          # 97 : [bp@W1[:2] + b1 | bp | 0]
_R_W1SPD = _R_BNEXT + 1       # 98 : [W1[2,:] | 0]   speed row of embedding layer 1
_R_W1X = _R_W1SPD + 1         # 99 : [W1[0,:] | 0]
_R_W1Y = _R_W1X + 1           # 100: [W1[1,:] | 0]
_R_B1 = _R_W1Y + 1            # 101: [b1 | 0]
_WSLAB_ROWS = 104             # padded to a multiple of 8 sublanes


# ----------------------------- kernel ---------------------------------------
def decoder_kernel(wslab_ref, state_ref, out_ref):
    H = H_DIM
    T = PRED_LEN

    # --- one-time loads / prep (off the 8-step recurrence critical path) ---
    wfused = wslab_ref[_R_WFUSED:_R_WFUSED + E2 + H, :].astype(jnp.bfloat16)  # (64,128)
    wnext = wslab_ref[_R_WNEXT:_R_WNEXT + H, :].astype(jnp.bfloat16)          # (32,128)
    bl = wslab_ref[_R_BL:_R_BL + 1, :]                                        # (1,128)
    bnext_base = wslab_ref[_R_BNEXT:_R_BNEXT + 1, :]                          # (1,128)
    w1_spd = wslab_ref[_R_W1SPD:_R_W1SPD + 1, :]                              # (1,128)
    w1_x = wslab_ref[_R_W1X:_R_W1X + 1, 0:E2]                                 # (1,32)
    w1_y = wslab_ref[_R_W1Y:_R_W1Y + 1, 0:E2]
    b1 = wslab_ref[_R_B1:_R_B1 + 1, 0:E2]

    h = state_ref[:, 0:H]                      # (B,32)
    c = state_ref[:, H:2 * H]                  # (B,32)
    spd = state_ref[:, 2 * H:2 * H + T]        # (B,T)
    lpr = state_ref[:, 2 * H + T:2 * H + T + 2]  # (B,2)

    # Per-step bias of the fused (hidden2pos + next-embedding-layer-1) matmul, hoisted
    # out of the recurrence: depends only on speeds / constants. (rel columns get bp.)
    bnext = []
    for t in range(T):
        i = min(t + 1, T - 1)   # final-step speed is never consumed downstream
        bnext.append(bnext_base + spd[:, i:i + 1] * w1_spd)       # (B,128)

    # Initial spatial embedding: layer 1 as VPU broadcast FMAs (K=3 is far too small
    # for the MXU); layer 2 is folded into wfused.
    pre = lpr[:, 0:1] * w1_x + lpr[:, 1:2] * w1_y + spd[:, 0:1] * w1_spd[:, 0:E2] + b1
    act = jnp.where(pre > 0, pre, LEAKY_SLOPE * pre)              # (B,32)

    for t in range(T):  # T = 8, fully unrolled at trace time
        # All four LSTM gates in ONE bf16 MXU op: [act | h] @ [[W2@Wih];[Whh]] + bias.
        xh = jnp.concatenate([act, h], axis=1).astype(jnp.bfloat16)          # (B,64)
        gates = jnp.dot(xh, wfused, preferred_element_type=jnp.float32) + bl  # (B,128)

        # Single full-vreg EUP pass: the g columns were pre-scaled by 2 so that
        # tanh(g) == 2*sigmoid(2g) - 1 falls out of the same sigmoid.
        sig = jax.nn.sigmoid(gates)
        i_g = sig[:, 0 * H:1 * H]
        f_g = sig[:, 1 * H:2 * H]
        g_g = 2.0 * sig[:, 2 * H:3 * H] - 1.0
        o_g = sig[:, 3 * H:4 * H]
        c = f_g * c + i_g * g_g
        h = o_g * jnp.tanh(c)

        # hidden2pos + next-step embedding layer-1 in ONE bf16 MXU op:
        #   nxt[:, :E2]     = rel@W1[:2] + speed_{t+1}*W1[2] + b1  (next pre-activation)
        #   nxt[:, E2:E2+2] = rel = h@Wp + bp
        nxt = jnp.dot(h.astype(jnp.bfloat16), wnext,
                      preferred_element_type=jnp.float32) + bnext[t]
        out_ref[:, 2 * t:2 * t + 2] = nxt[:, E2:E2 + 2]   # rel_pos -> lane-dense slab

        if t + 1 < T:   # next-input embedding is dead at the final step -> skip
            pre = nxt[:, 0:E2]
            act = jnp.where(pre > 0, pre, LEAKY_SLOPE * pre)

    out_ref[:, 2 * T:2 * T + H] = h


# ----------------------------- wrapper ---------------------------------------
def _pack_weights(params):
    """Fold & pack all decoder weights into one lane-dense (104, 128) f32 slab."""
    hi = jax.lax.Precision.HIGHEST
    H = H_DIM
    W1, b1 = params["W1"], params["b1"]
    W2, b2 = params["W2"], params["b2"]
    Wih, Whh, bl = params["Wih"], params["Whh"], params["bl"]
    Wp, bp = params["Wp"], params["bp"]

    Wxy = W1[0:2, :]                                                    # (2, 2E)

    # Fold spatial-embedding layer 2 into the LSTM input weights, fuse with Whh.
    wfused = jnp.concatenate([jnp.dot(W2, Wih, precision=hi), Whh], axis=0)   # (64,4H)
    bl_tot = bl + jnp.dot(b2, Wih, precision=hi)                              # (1,4H)
    # Pre-scale g-gate columns by 2 (tanh(x) = 2*sigmoid(2x) - 1).
    gscale = jnp.concatenate(
        [jnp.ones((1, 2 * H), jnp.float32), jnp.full((1, H), 2.0, jnp.float32),
         jnp.ones((1, H), jnp.float32)], axis=1)
    wfused = wfused * gscale
    bl_tot = bl_tot * gscale

    # Fused hidden2pos + next-embedding-layer-1 weight: h @ [Wp@W1[:2] | Wp | 0].
    wnext = jnp.zeros((H, G), jnp.float32)
    wnext = wnext.at[:, 0:E2].set(jnp.dot(Wp, Wxy, precision=hi))
    wnext = wnext.at[:, E2:E2 + 2].set(Wp)

    def row(vals, width):
        return jnp.zeros((1, G), jnp.float32).at[:, 0:width].set(vals)

    bnext_base = row(jnp.dot(bp, Wxy, precision=hi) + b1, E2)
    bnext_base = bnext_base.at[:, E2:E2 + 2].set(bp)

    return jnp.concatenate(
        [wfused,                                   # rows   0:64
         wnext,                                    # rows  64:96
         bl_tot,                                   # row   96
         bnext_base,                               # row   97
         row(W1[2:3, :], E2),                      # row   98
         row(W1[0:1, :], E2),                      # row   99
         row(W1[1:2, :], E2),                      # row  100
         row(b1, E2),                              # row  101
         jnp.zeros((_WSLAB_ROWS - (_R_B1 + 1), G), jnp.float32)],   # pad to 104
        axis=0)


@jax.jit
def decoder_forward(params, last_pos, last_pos_rel, h0, c0, pred_ped_speed):
    # `last_pos` only feeds the (dead) curr_pos carry under these config flags.
    del last_pos
    B = last_pos_rel.shape[0]
    H, T = H_DIM, PRED_LEN

    wslab = _pack_weights(params)                                   # (104, 128)
    speed_bt = jnp.transpose(pred_ped_speed[:, :, 0], (1, 0))       # (B, T) lane-dense
    state = jnp.concatenate([h0, c0, speed_bt, last_pos_rel], axis=1)   # (B, 2H+T+2)

    out = pl.pallas_call(
        decoder_kernel,
        grid=(1,),  # single invocation; whole recurrence runs inside the kernel
        in_specs=[pl.BlockSpec((_WSLAB_ROWS, G), lambda i: (0, 0)),
                  pl.BlockSpec((B, 2 * H + T + 2), lambda i: (0, 0))],
        out_specs=pl.BlockSpec((B, 2 * T + H), lambda i: (0, 0)),
        out_shape=jax.ShapeDtypeStruct((B, 2 * T + H), jnp.float32),
        compiler_params=pltpu.CompilerParams(dimension_semantics=("arbitrary",)),
    )(wslab, state)

    # Unpack the lane-dense output slab (layout plumbing only).
    pred_rel = out[:, 0:2 * T].reshape(B, T, 2).transpose(1, 0, 2)  # (T, B, 2)
    h_final = out[:, 2 * T:2 * T + H]                               # (B, H)
    return pred_rel, h_final


# ----------------------------- reference (plain JAX) -------------------------
def decoder_reference(params, last_pos, last_pos_rel, h0, c0, pred_ped_speed):
    H = H_DIM

    def spatial_embed(x3):
        pre = x3 @ params["W1"] + params["b1"]
        act = jnp.where(pre > 0, pre, LEAKY_SLOPE * pre)
        return act @ params["W2"] + params["b2"]

    emb = spatial_embed(jnp.concatenate([last_pos_rel, pred_ped_speed[0]], axis=1))
    h, c, lp = h0, c0, last_pos
    rels = []
    for t in range(PRED_LEN):
        gates = emb @ params["Wih"] + h @ params["Whh"] + params["bl"]
        i_g = jax.nn.sigmoid(gates[:, 0 * H:1 * H])
        f_g = jax.nn.sigmoid(gates[:, 1 * H:2 * H])
        g_g = jnp.tanh(gates[:, 2 * H:3 * H])
        o_g = jax.nn.sigmoid(gates[:, 3 * H:4 * H])
        c = f_g * c + i_g * g_g
        h = o_g * jnp.tanh(c)
        rel = h @ params["Wp"] + params["bp"]
        lp = rel + lp
        sp = pred_ped_speed[min(t + 1, PRED_LEN - 1)]
        emb = spatial_embed(jnp.concatenate([rel, sp], axis=1))
        rels.append(rel)
    return jnp.stack(rels, axis=0), h


# ----------------------------- main -------------------------------------------
def init_params(key):
    E, H = EMBEDDING_DIM, H_DIM
    ks = jax.random.split(key, 10)

    def u(k, shape, fan_in):
        bound = 1.0 / np.sqrt(fan_in)
        return jax.random.uniform(k, shape, jnp.float32, -bound, bound)

    return {
        # spatial_embedding: Linear(3, 2E) -> LeakyReLU -> Linear(2E, E)
        "W1": u(ks[0], (3, 2 * E), 3),
        "b1": u(ks[1], (1, 2 * E), 3),
        "W2": u(ks[2], (2 * E, E), 2 * E),
        "b2": u(ks[3], (1, E), 2 * E),
        # LSTM(E, H), 1 layer; gates ordered [i, f, g, o]
        "Wih": u(ks[4], (E, 4 * H), H),
        "Whh": u(ks[5], (H, 4 * H), H),
        "bl": u(ks[6], (1, 4 * H), H),
        # hidden2pos: Linear(H, 2)
        "Wp": u(ks[7], (H, 2), H),
        "bp": u(ks[8], (1, 2), H),
    }


if __name__ == "__main__":
    key = jax.random.PRNGKey(0)
    k_par, k_lp, k_lpr, k_h, k_c, k_sp = jax.random.split(key, 6)

    params = init_params(k_par)
    last_pos = jax.random.normal(k_lp, (BATCH, 2), jnp.float32)
    last_pos_rel = jax.random.normal(k_lpr, (BATCH, 2), jnp.float32)
    h0 = jax.random.normal(k_h, (BATCH, H_DIM), jnp.float32) * 0.1
    c0 = jax.random.normal(k_c, (BATCH, H_DIM), jnp.float32) * 0.1
    # pred_ped_speed: (PRED_LEN, batch, 1), values in (0, 1) like sigmoid-ed speeds
    pred_ped_speed = jax.nn.sigmoid(
        jax.random.normal(k_sp, (PRED_LEN, BATCH, 1), jnp.float32))

    rel_traj, h_final = decoder_forward(params, last_pos, last_pos_rel, h0, c0,
                                        pred_ped_speed)
    jax.block_until_ready((rel_traj, h_final))

    rel_ref, h_ref = decoder_reference(params, last_pos, last_pos_rel, h0, c0,
                                       pred_ped_speed)
    # Kernel uses bf16 MXU operands (per perf review); reference is pure f32, hence
    # the 1e-2 tolerances (measured divergence is ~1e-3).
    np.testing.assert_allclose(np.asarray(rel_traj), np.asarray(rel_ref),
                               rtol=1e-2, atol=1e-2)
    np.testing.assert_allclose(np.asarray(h_final), np.asarray(h_ref),
                               rtol=1e-2, atol=1e-2)

    print("KERNEL_OK")
</pallas_src>

<mosaic_0001>
module attributes {stable_mosaic.version = 11 : i64} {
  func.func @decoder_kernel(%arg0: i32, %arg1: memref<104x128xf32, #tpu.memory_space<vmem>>, %arg2: memref<8x74xf32, #tpu.memory_space<vmem>>, %arg3: memref<8x48xf32, #tpu.memory_space<vmem>>) attributes {dimension_semantics = [#tpu.dimension_semantics<arbitrary>], iteration_bounds = array<i64: 1>, scalar_prefetch = 0 : i64, scratch_operands = 0 : i64, tpu.core_type = #tpu.core_type<tc>, window_params = [{pipeline_mode = #tpu.pipeline_mode<synchronous>, transform_indices = @transform_0, window_bounds = array<i64: 104, 128>}, {pipeline_mode = #tpu.pipeline_mode<synchronous>, transform_indices = @transform_1, window_bounds = array<i64: 8, 74>}, {pipeline_mode = #tpu.pipeline_mode<synchronous>, transform_indices = @transform_2, window_bounds = array<i64: 8, 48>}]} {
    %c0 = arith.constant 0 : index
    %c0_0 = arith.constant 0 : index
    %0 = vector.load %arg1[%c0, %c0_0] : memref<104x128xf32, #tpu.memory_space<vmem>>, vector<64x128xf32>
    %1 = arith.truncf %0 : vector<64x128xf32> to vector<64x128xbf16>
    %c64 = arith.constant 64 : index
    %c0_1 = arith.constant 0 : index
    %2 = vector.load %arg1[%c64, %c0_1] : memref<104x128xf32, #tpu.memory_space<vmem>>, vector<32x128xf32>
    %3 = arith.truncf %2 : vector<32x128xf32> to vector<32x128xbf16>
    %c96 = arith.constant 96 : index
    %c0_2 = arith.constant 0 : index
    %4 = vector.load %arg1[%c96, %c0_2] : memref<104x128xf32, #tpu.memory_space<vmem>>, vector<1x128xf32>
    %c97 = arith.constant 97 : index
    %c0_3 = arith.constant 0 : index
    %5 = vector.load %arg1[%c97, %c0_3] : memref<104x128xf32, #tpu.memory_space<vmem>>, vector<1x128xf32>
    %c98 = arith.constant 98 : index
    %c0_4 = arith.constant 0 : index
    %6 = vector.load %arg1[%c98, %c0_4] : memref<104x128xf32, #tpu.memory_space<vmem>>, vector<1x128xf32>
    %c99 = arith.constant 99 : index
    %c0_5 = arith.constant 0 : index
    %7 = vector.load %arg1[%c99, %c0_5] : memref<104x128xf32, #tpu.memory_space<vmem>>, vector<1x32xf32>
    %c100 = arith.constant 100 : index
    %c0_6 = arith.constant 0 : index
    %8 = vector.load %arg1[%c100, %c0_6] : memref<104x128xf32, #tpu.memory_space<vmem>>, vector<1x32xf32>
    %c101 = arith.constant 101 : index
    %c0_7 = arith.constant 0 : index
    %9 = vector.load %arg1[%c101, %c0_7] : memref<104x128xf32, #tpu.memory_space<vmem>>, vector<1x32xf32>
    %c0_8 = arith.constant 0 : index
    %c0_9 = arith.constant 0 : index
    %10 = vector.load %arg2[%c0_8, %c0_9] : memref<8x74xf32, #tpu.memory_space<vmem>>, vector<8x32xf32>
    %c0_10 = arith.constant 0 : index
    %c32 = arith.constant 32 : index
    %11 = vector.load %arg2[%c0_10, %c32] : memref<8x74xf32, #tpu.memory_space<vmem>>, vector<8x32xf32>
    %c0_11 = arith.constant 0 : index
    %c64_12 = arith.constant 64 : index
    %12 = vector.load %arg2[%c0_11, %c64_12] : memref<8x74xf32, #tpu.memory_space<vmem>>, vector<8x8xf32>
    %c0_13 = arith.constant 0 : index
    %c72 = arith.constant 72 : index
    %13 = vector.load %arg2[%c0_13, %c72] : memref<8x74xf32, #tpu.memory_space<vmem>>, vector<8x2xf32>
    %14 = vector.extract_strided_slice %12 {offsets = [0, 1], sizes = [8, 1], strides = [1, 1]} : vector<8x8xf32> to vector<8x1xf32>
    %15 = vector.broadcast %14 : vector<8x1xf32> to vector<8x128xf32>
    %16 = vector.broadcast %6 : vector<1x128xf32> to vector<8x128xf32>
    %17 = arith.mulf %15, %16 : vector<8x128xf32>
    %18 = vector.broadcast %5 : vector<1x128xf32> to vector<8x128xf32>
    %19 = arith.addf %18, %17 : vector<8x128xf32>
    %20 = vector.extract_strided_slice %12 {offsets = [0, 2], sizes = [8, 1], strides = [1, 1]} : vector<8x8xf32> to vector<8x1xf32>
    %21 = vector.broadcast %20 : vector<8x1xf32> to vector<8x128xf32>
    %22 = vector.broadcast %6 : vector<1x128xf32> to vector<8x128xf32>
    %23 = arith.mulf %21, %22 : vector<8x128xf32>
    %24 = vector.broadcast %5 : vector<1x128xf32> to vector<8x128xf32>
    %25 = arith.addf %24, %23 : vector<8x128xf32>
    %26 = vector.extract_strided_slice %12 {offsets = [0, 3], sizes = [8, 1], strides = [1, 1]} : vector<8x8xf32> to vector<8x1xf32>
    %27 = vector.broadcast %26 : vector<8x1xf32> to vector<8x128xf32>
    %28 = vector.broadcast %6 : vector<1x128xf32> to vector<8x128xf32>
    %29 = arith.mulf %27, %28 : vector<8x128xf32>
    %30 = vector.broadcast %5 : vector<1x128xf32> to vector<8x128xf32>
    %31 = arith.addf %30, %29 : vector<8x128xf32>
    %32 = vector.extract_strided_slice %12 {offsets = [0, 4], sizes = [8, 1], strides = [1, 1]} : vector<8x8xf32> to vector<8x1xf32>
    %33 = vector.broadcast %32 : vector<8x1xf32> to vector<8x128xf32>
    %34 = vector.broadcast %6 : vector<1x128xf32> to vector<8x128xf32>
    %35 = arith.mulf %33, %34 : vector<8x128xf32>
    %36 = vector.broadcast %5 : vector<1x128xf32> to vector<8x128xf32>
    %37 = arith.addf %36, %35 : vector<8x128xf32>
    %38 = vector.extract_strided_slice %12 {offsets = [0, 5], sizes = [8, 1], strides = [1, 1]} : vector<8x8xf32> to vector<8x1xf32>
    %39 = vector.broadcast %38 : vector<8x1xf32> to vector<8x128xf32>
    %40 = vector.broadcast %6 : vector<1x128xf32> to vector<8x128xf32>
    %41 = arith.mulf %39, %40 : vector<8x128xf32>
    %42 = vector.broadcast %5 : vector<1x128xf32> to vector<8x128xf32>
    %43 = arith.addf %42, %41 : vector<8x128xf32>
    %44 = vector.extract_strided_slice %12 {offsets = [0, 6], sizes = [8, 1], strides = [1, 1]} : vector<8x8xf32> to vector<8x1xf32>
    %45 = vector.broadcast %44 : vector<8x1xf32> to vector<8x128xf32>
    %46 = vector.broadcast %6 : vector<1x128xf32> to vector<8x128xf32>
    %47 = arith.mulf %45, %46 : vector<8x128xf32>
    %48 = vector.broadcast %5 : vector<1x128xf32> to vector<8x128xf32>
    %49 = arith.addf %48, %47 : vector<8x128xf32>
    %50 = vector.extract_strided_slice %12 {offsets = [0, 7], sizes = [8, 1], strides = [1, 1]} : vector<8x8xf32> to vector<8x1xf32>
    %51 = vector.broadcast %50 : vector<8x1xf32> to vector<8x128xf32>
    %52 = vector.broadcast %6 : vector<1x128xf32> to vector<8x128xf32>
    %53 = arith.mulf %51, %52 : vector<8x128xf32>
    %54 = vector.broadcast %5 : vector<1x128xf32> to vector<8x128xf32>
    %55 = arith.addf %54, %53 : vector<8x128xf32>
    %56 = vector.extract_strided_slice %12 {offsets = [0, 7], sizes = [8, 1], strides = [1, 1]} : vector<8x8xf32> to vector<8x1xf32>
    %57 = vector.broadcast %56 : vector<8x1xf32> to vector<8x128xf32>
    %58 = vector.broadcast %6 : vector<1x128xf32> to vector<8x128xf32>
    %59 = arith.mulf %57, %58 : vector<8x128xf32>
    %60 = vector.broadcast %5 : vector<1x128xf32> to vector<8x128xf32>
    %61 = arith.addf %60, %59 : vector<8x128xf32>
    %62 = vector.extract_strided_slice %13 {offsets = [0, 0], sizes = [8, 1], strides = [1, 1]} : vector<8x2xf32> to vector<8x1xf32>
    %63 = vector.broadcast %62 : vector<8x1xf32> to vector<8x32xf32>
    %64 = vector.broadcast %7 : vector<1x32xf32> to vector<8x32xf32>
    %65 = arith.mulf %63, %64 : vector<8x32xf32>
    %66 = vector.extract_strided_slice %13 {offsets = [0, 1], sizes = [8, 1], strides = [1, 1]} : vector<8x2xf32> to vector<8x1xf32>
    %67 = vector.broadcast %66 : vector<8x1xf32> to vector<8x32xf32>
    %68 = vector.broadcast %8 : vector<1x32xf32> to vector<8x32xf32>
    %69 = arith.mulf %67, %68 : vector<8x32xf32>
    %70 = arith.addf %65, %69 : vector<8x32xf32>
    %71 = vector.extract_strided_slice %12 {offsets = [0, 0], sizes = [8, 1], strides = [1, 1]} : vector<8x8xf32> to vector<8x1xf32>
    %72 = vector.extract_strided_slice %6 {offsets = [0, 0], sizes = [1, 32], strides = [1, 1]} : vector<1x128xf32> to vector<1x32xf32>
    %73 = vector.broadcast %71 : vector<8x1xf32> to vector<8x32xf32>
    %74 = vector.broadcast %72 : vector<1x32xf32> to vector<8x32xf32>
    %75 = arith.mulf %73, %74 : vector<8x32xf32>
    %76 = arith.addf %70, %75 : vector<8x32xf32>
    %77 = vector.broadcast %9 : vector<1x32xf32> to vector<8x32xf32>
    %78 = arith.addf %76, %77 : vector<8x32xf32>
    %cst = arith.constant 0.000000e+00 : f32
    %79 = vector.broadcast %cst : f32 to vector<8x32xf32>
    %80 = arith.cmpf ogt, %78, %79 : vector<8x32xf32>
    %cst_14 = arith.constant 0.00999999977 : f32
    %81 = vector.broadcast %cst_14 : f32 to vector<8x32xf32>
    %82 = arith.mulf %81, %78 : vector<8x32xf32>
    %83 = arith.select %80, %78, %82 : vector<8x32xi1>, vector<8x32xf32>
    %84 = tpu.concatenate %83, %10 in 1 : vector<8x32xf32>, vector<8x32xf32> -> vector<8x64xf32>
    %85 = arith.truncf %84 : vector<8x64xf32> to vector<8x64xbf16>
    %cst_15 = arith.constant dense<0.000000e+00> : vector<8x128xf32>
    %86 = tpu.matmul %85, %1, %cst_15 {dimension_numbers = #tpu.dot_dimension_numbers<[1], [0], [0], [1], [0, 0, 1, 1], [], []>} : vector<8x64xbf16>, vector<64x128xbf16>, vector<8x128xf32> -> vector<8x128xf32>
    %87 = vector.broadcast %4 : vector<1x128xf32> to vector<8x128xf32>
    %88 = arith.addf %86, %87 : vector<8x128xf32>
    %89 = arith.negf %88 : vector<8x128xf32>
    %90 = math.exp %89 : vector<8x128xf32>
    %cst_16 = arith.constant 1.000000e+00 : f32
    %91 = vector.broadcast %cst_16 : f32 to vector<8x128xf32>
    %92 = arith.addf %91, %90 : vector<8x128xf32>
    %93 = arith.divf %91, %92 : vector<8x128xf32>
    %94 = vector.extract_strided_slice %93 {offsets = [0, 0], sizes = [8, 32], strides = [1, 1]} : vector<8x128xf32> to vector<8x32xf32>
    %95 = vector.extract_strided_slice %93 {offsets = [0, 32], sizes = [8, 32], strides = [1, 1]} : vector<8x128xf32> to vector<8x32xf32>
    %96 = vector.extract_strided_slice %93 {offsets = [0, 64], sizes = [8, 32], strides = [1, 1]} : vector<8x128xf32> to vector<8x32xf32>
    %cst_17 = arith.constant 2.000000e+00 : f32
    %97 = vector.broadcast %cst_17 : f32 to vector<8x32xf32>
    %98 = arith.mulf %97, %96 : vector<8x32xf32>
    %cst_18 = arith.constant 1.000000e+00 : f32
    %99 = vector.broadcast %cst_18 : f32 to vector<8x32xf32>
    %100 = arith.subf %98, %99 : vector<8x32xf32>
    %101 = vector.extract_strided_slice %93 {offsets = [0, 96], sizes = [8, 32], strides = [1, 1]} : vector<8x128xf32> to vector<8x32xf32>
    %102 = arith.mulf %95, %11 : vector<8x32xf32>
    %103 = arith.mulf %94, %100 : vector<8x32xf32>
    %104 = arith.addf %102, %103 : vector<8x32xf32>
    %105 = math.tanh %104 : vector<8x32xf32>
    %106 = arith.mulf %101, %105 : vector<8x32xf32>
    %107 = arith.truncf %106 : vector<8x32xf32> to vector<8x32xbf16>
    %cst_19 = arith.constant dense<0.000000e+00> : vector<8x128xf32>
    %108 = tpu.matmul %107, %3, %cst_19 {dimension_numbers = #tpu.dot_dimension_numbers<[1], [0], [0], [1], [0, 0, 1, 1], [], []>} : vector<8x32xbf16>, vector<32x128xbf16>, vector<8x128xf32> -> vector<8x128xf32>
    %109 = arith.addf %108, %19 : vector<8x128xf32>
    %110 = vector.extract_strided_slice %109 {offsets = [0, 32], sizes = [8, 2], strides = [1, 1]} : vector<8x128xf32> to vector<8x2xf32>
    %c0_20 = arith.constant 0 : index
    %c0_21 = arith.constant 0 : index
    %111 = vector.load %arg3[%c0_20, %c0_21] : memref<8x48xf32, #tpu.memory_space<vmem>>, vector<8x2xf32>
    tpu.vector_store %arg3[%c0_20, %c0_21], %110 {strides = array<i32>} : memref<8x48xf32, #tpu.memory_space<vmem>>, vector<8x2xf32>,
    %112 = vector.extract_strided_slice %109 {offsets = [0, 0], sizes = [8, 32], strides = [1, 1]} : vector<8x128xf32> to vector<8x32xf32>
    %cst_22 = arith.constant 0.000000e+00 : f32
    %113 = vector.broadcast %cst_22 : f32 to vector<8x32xf32>
    %114 = arith.cmpf ogt, %112, %113 : vector<8x32xf32>
    %cst_23 = arith.constant 0.00999999977 : f32
    %115 = vector.broadcast %cst_23 : f32 to vector<8x32xf32>
    %116 = arith.mulf %115, %112 : vector<8x32xf32>
    %117 = arith.select %114, %112, %116 : vector<8x32xi1>, vector<8x32xf32>
    %118 = tpu.concatenate %117, %106 in 1 : vector<8x32xf32>, vector<8x32xf32> -> vector<8x64xf32>
    %119 = arith.truncf %118 : vector<8x64xf32> to vector<8x64xbf16>
    %cst_24 = arith.constant dense<0.000000e+00> : vector<8x128xf32>
    %120 = tpu.matmul %119, %1, %cst_24 {dimension_numbers = #tpu.dot_dimension_numbers<[1], [0], [0], [1], [0, 0, 1, 1], [], []>} : vector<8x64xbf16>, vector<64x128xbf16>, vector<8x128xf32> -> vector<8x128xf32>
    %121 = vector.broadcast %4 : vector<1x128xf32> to vector<8x128xf32>
    %122 = arith.addf %120, %121 : vector<8x128xf32>
    %123 = arith.negf %122 : vector<8x128xf32>
    %124 = math.exp %123 : vector<8x128xf32>
    %cst_25 = arith.constant 1.000000e+00 : f32
    %125 = vector.broadcast %cst_25 : f32 to vector<8x128xf32>
    %126 = arith.addf %125, %124 : vector<8x128xf32>
    %127 = arith.divf %125, %126 : vector<8x128xf32>
    %128 = vector.extract_strided_slice %127 {offsets = [0, 0], sizes = [8, 32], strides = [1, 1]} : vector<8x128xf32> to vector<8x32xf32>
    %129 = vector.extract_strided_slice %127 {offsets = [0, 32], sizes = [8, 32], strides = [1, 1]} : vector<8x128xf32> to vector<8x32xf32>
    %130 = vector.extract_strided_slice %127 {offsets = [0, 64], sizes = [8, 32], strides = [1, 1]} : vector<8x128xf32> to vector<8x32xf32>
    %cst_26 = arith.constant 2.000000e+00 : f32
    %131 = vector.broadcast %cst_26 : f32 to vector<8x32xf32>
    %132 = arith.mulf %131, %130 : vector<8x32xf32>
    %cst_27 = arith.constant 1.000000e+00 : f32
    %133 = vector.broadcast %cst_27 : f32 to vector<8x32xf32>
    %134 = arith.subf %132, %133 : vector<8x32xf32>
    %135 = vector.extract_strided_slice %127 {offsets = [0, 96], sizes = [8, 32], strides = [1, 1]} : vector<8x128xf32> to vector<8x32xf32>
    %136 = arith.mulf %129, %104 : vector<8x32xf32>
    %137 = arith.mulf %128, %134 : vector<8x32xf32>
    %138 = arith.addf %136, %137 : vector<8x32xf32>
    %139 = math.tanh %138 : vector<8x32xf32>
    %140 = arith.mulf %135, %139 : vector<8x32xf32>
    %141 = arith.truncf %140 : vector<8x32xf32> to vector<8x32xbf16>
    %cst_28 = arith.constant dense<0.000000e+00> : vector<8x128xf32>
    %142 = tpu.matmul %141, %3, %cst_28 {dimension_numbers = #tpu.dot_dimension_numbers<[1], [0], [0], [1], [0, 0, 1, 1], [], []>} : vector<8x32xbf16>, vector<32x128xbf16>, vector<8x128xf32> -> vector<8x128xf32>
    %143 = arith.addf %142, %25 : vector<8x128xf32>
    %144 = vector.extract_strided_slice %143 {offsets = [0, 32], sizes = [8, 2], strides = [1, 1]} : vector<8x128xf32> to vector<8x2xf32>
    %c0_29 = arith.constant 0 : index
    %c2 = arith.constant 2 : index
    %145 = vector.load %arg3[%c0_29, %c2] : memref<8x48xf32, #tpu.memory_space<vmem>>, vector<8x2xf32>
    tpu.vector_store %arg3[%c0_29, %c2], %144 {strides = array<i32>} : memref<8x48xf32, #tpu.memory_space<vmem>>, vector<8x2xf32>,
    %146 = vector.extract_strided_slice %143 {offsets = [0, 0], sizes = [8, 32], strides = [1, 1]} : vector<8x128xf32> to vector<8x32xf32>
    %cst_30 = arith.constant 0.000000e+00 : f32
    %147 = vector.broadcast %cst_30 : f32 to vector<8x32xf32>
    %148 = arith.cmpf ogt, %146, %147 : vector<8x32xf32>
    %cst_31 = arith.constant 0.00999999977 : f32
    %149 = vector.broadcast %cst_31 : f32 to vector<8x32xf32>
    %150 = arith.mulf %149, %146 : vector<8x32xf32>
    %151 = arith.select %148, %146, %150 : vector<8x32xi1>, vector<8x32xf32>
    %152 = tpu.concatenate %151, %140 in 1 : vector<8x32xf32>, vector<8x32xf32> -> vector<8x64xf32>
    %153 = arith.truncf %152 : vector<8x64xf32> to vector<8x64xbf16>
    %cst_32 = arith.constant dense<0.000000e+00> : vector<8x128xf32>
    %154 = tpu.matmul %153, %1, %cst_32 {dimension_numbers = #tpu.dot_dimension_numbers<[1], [0], [0], [1], [0, 0, 1, 1], [], []>} : vector<8x64xbf16>, vector<64x128xbf16>, vector<8x128xf32> -> vector<8x128xf32>
    %155 = vector.broadcast %4 : vector<1x128xf32> to vector<8x128xf32>
    %156 = arith.addf %154, %155 : vector<8x128xf32>
    %157 = arith.negf %156 : vector<8x128xf32>
    %158 = math.exp %157 : vector<8x128xf32>
    %cst_33 = arith.constant 1.000000e+00 : f32
    %159 = vector.broadcast %cst_33 : f32 to vector<8x128xf32>
    %160 = arith.addf %159, %158 : vector<8x128xf32>
    %161 = arith.divf %159, %160 : vector<8x128xf32>
    %162 = vector.extract_strided_slice %161 {offsets = [0, 0], sizes = [8, 32], strides = [1, 1]} : vector<8x128xf32> to vector<8x32xf32>
    %163 = vector.extract_strided_slice %161 {offsets = [0, 32], sizes = [8, 32], strides = [1, 1]} : vector<8x128xf32> to vector<8x32xf32>
    %164 = vector.extract_strided_slice %161 {offsets = [0, 64], sizes = [8, 32], strides = [1, 1]} : vector<8x128xf32> to vector<8x32xf32>
    %cst_34 = arith.constant 2.000000e+00 : f32
    %165 = vector.broadcast %cst_34 : f32 to vector<8x32xf32>
    %166 = arith.mulf %165, %164 : vector<8x32xf32>
    %cst_35 = arith.constant 1.000000e+00 : f32
    %167 = vector.broadcast %cst_35 : f32 to vector<8x32xf32>
    %168 = arith.subf %166, %167 : vector<8x32xf32>
    %169 = vector.extract_strided_slice %161 {offsets = [0, 96], sizes = [8, 32], strides = [1, 1]} : vector<8x128xf32> to vector<8x32xf32>
    %170 = arith.mulf %163, %138 : vector<8x32xf32>
    %171 = arith.mulf %162, %168 : vector<8x32xf32>
    %172 = arith.addf %170, %171 : vector<8x32xf32>
    %173 = math.tanh %172 : vector<8x32xf32>
    %174 = arith.mulf %169, %173 : vector<8x32xf32>
    %175 = arith.truncf %174 : vector<8x32xf32> to vector<8x32xbf16>
    %cst_36 = arith.constant dense<0.000000e+00> : vector<8x128xf32>
    %176 = tpu.matmul %175, %3, %cst_36 {dimension_numbers = #tpu.dot_dimension_numbers<[1], [0], [0], [1], [0, 0, 1, 1], [], []>} : vector<8x32xbf16>, vector<32x128xbf16>, vector<8x128xf32> -> vector<8x128xf32>
    %177 = arith.addf %176, %31 : vector<8x128xf32>
    %178 = vector.extract_strided_slice %177 {offsets = [0, 32], sizes = [8, 2], strides = [1, 1]} : vector<8x128xf32> to vector<8x2xf32>
    %c0_37 = arith.constant 0 : index
    %c4 = arith.constant 4 : index
    %179 = vector.load %arg3[%c0_37, %c4] : memref<8x48xf32, #tpu.memory_space<vmem>>, vector<8x2xf32>
    tpu.vector_store %arg3[%c0_37, %c4], %178 {strides = array<i32>} : memref<8x48xf32, #tpu.memory_space<vmem>>, vector<8x2xf32>,
    %180 = vector.extract_strided_slice %177 {offsets = [0, 0], sizes = [8, 32], strides = [1, 1]} : vector<8x128xf32> to vector<8x32xf32>
    %cst_38 = arith.constant 0.000000e+00 : f32
    %181 = vector.broadcast %cst_38 : f32 to vector<8x32xf32>
    %182 = arith.cmpf ogt, %180, %181 : vector<8x32xf32>
    %cst_39 = arith.constant 0.00999999977 : f32
    %183 = vector.broadcast %cst_39 : f32 to vector<8x32xf32>
    %184 = arith.mulf %183, %180 : vector<8x32xf32>
    %185 = arith.select %182, %180, %184 : vector<8x32xi1>, vector<8x32xf32>
    %186 = tpu.concatenate %185, %174 in 1 : vector<8x32xf32>, vector<8x32xf32> -> vector<8x64xf32>
    %187 = arith.truncf %186 : vector<8x64xf32> to vector<8x64xbf16>
    %cst_40 = arith.constant dense<0.000000e+00> : vector<8x128xf32>
    %188 = tpu.matmul %187, %1, %cst_40 {dimension_numbers = #tpu.dot_dimension_numbers<[1], [0], [0], [1], [0, 0, 1, 1], [], []>} : vector<8x64xbf16>, vector<64x128xbf16>, vector<8x128xf32> -> vector<8x128xf32>
    %189 = vector.broadcast %4 : vector<1x128xf32> to vector<8x128xf32>
    %190 = arith.addf %188, %189 : vector<8x128xf32>
    %191 = arith.negf %190 : vector<8x128xf32>
    %192 = math.exp %191 : vector<8x128xf32>
    %cst_41 = arith.constant 1.000000e+00 : f32
    %193 = vector.broadcast %cst_41 : f32 to vector<8x128xf32>
    %194 = arith.addf %193, %192 : vector<8x128xf32>
    %195 = arith.divf %193, %194 : vector<8x128xf32>
    %196 = vector.extract_strided_slice %195 {offsets = [0, 0], sizes = [8, 32], strides = [1, 1]} : vector<8x128xf32> to vector<8x32xf32>
    %197 = vector.extract_strided_slice %195 {offsets = [0, 32], sizes = [8, 32], strides = [1, 1]} : vector<8x128xf32> to vector<8x32xf32>
    %198 = vector.extract_strided_slice %195 {offsets = [0, 64], sizes = [8, 32], strides = [1, 1]} : vector<8x128xf32> to vector<8x32xf32>
    %cst_42 = arith.constant 2.000000e+00 : f32
    %199 = vector.broadcast %cst_42 : f32 to vector<8x32xf32>
    %200 = arith.mulf %199, %198 : vector<8x32xf32>
    %cst_43 = arith.constant 1.000000e+00 : f32
    %201 = vector.broadcast %cst_43 : f32 to vector<8x32xf32>
    %202 = arith.subf %200, %201 : vector<8x32xf32>
    %203 = vector.extract_strided_slice %195 {offsets = [0, 96], sizes = [8, 32], strides = [1, 1]} : vector<8x128xf32> to vector<8x32xf32>
    %204 = arith.mulf %197, %172 : vector<8x32xf32>
    %205 = arith.mulf %196, %202 : vector<8x32xf32>
    %206 = arith.addf %204, %205 : vector<8x32xf32>
    %207 = math.tanh %206 : vector<8x32xf32>
    %208 = arith.mulf %203, %207 : vector<8x32xf32>
    %209 = arith.truncf %208 : vector<8x32xf32> to vector<8x32xbf16>
    %cst_44 = arith.constant dense<0.000000e+00> : vector<8x128xf32>
    %210 = tpu.matmul %209, %3, %cst_44 {dimension_numbers = #tpu.dot_dimension_numbers<[1], [0], [0], [1], [0, 0, 1, 1], [], []>} : vector<8x32xbf16>, vector<32x128xbf16>, vector<8x128xf32> -> vector<8x128xf32>
    %211 = arith.addf %210, %37 : vector<8x128xf32>
    %212 = vector.extract_strided_slice %211 {offsets = [0, 32], sizes = [8, 2], strides = [1, 1]} : vector<8x128xf32> to vector<8x2xf32>
    %c0_45 = arith.constant 0 : index
    %c6 = arith.constant 6 : index
    %213 = vector.load %arg3[%c0_45, %c6] : memref<8x48xf32, #tpu.memory_space<vmem>>, vector<8x2xf32>
    tpu.vector_store %arg3[%c0_45, %c6], %212 {strides = array<i32>} : memref<8x48xf32, #tpu.memory_space<vmem>>, vector<8x2xf32>,
    %214 = vector.extract_strided_slice %211 {offsets = [0, 0], sizes = [8, 32], strides = [1, 1]} : vector<8x128xf32> to vector<8x32xf32>
    %cst_46 = arith.constant 0.000000e+00 : f32
    %215 = vector.broadcast %cst_46 : f32 to vector<8x32xf32>
    %216 = arith.cmpf ogt, %214, %215 : vector<8x32xf32>
    %cst_47 = arith.constant 0.00999999977 : f32
    %217 = vector.broadcast %cst_47 : f32 to vector<8x32xf32>
    %218 = arith.mulf %217, %214 : vector<8x32xf32>
    %219 = arith.select %216, %214, %218 : vector<8x32xi1>, vector<8x32xf32>
    %220 = tpu.concatenate %219, %208 in 1 : vector<8x32xf32>, vector<8x32xf32> -> vector<8x64xf32>
    %221 = arith.truncf %220 : vector<8x64xf32> to vector<8x64xbf16>
    %cst_48 = arith.constant dense<0.000000e+00> : vector<8x128xf32>
    %222 = tpu.matmul %221, %1, %cst_48 {dimension_numbers = #tpu.dot_dimension_numbers<[1], [0], [0], [1], [0, 0, 1, 1], [], []>} : vector<8x64xbf16>, vector<64x128xbf16>, vector<8x128xf32> -> vector<8x128xf32>
    %223 = vector.broadcast %4 : vector<1x128xf32> to vector<8x128xf32>
    %224 = arith.addf %222, %223 : vector<8x128xf32>
    %225 = arith.negf %224 : vector<8x128xf32>
    %226 = math.exp %225 : vector<8x128xf32>
    %cst_49 = arith.constant 1.000000e+00 : f32
    %227 = vector.broadcast %cst_49 : f32 to vector<8x128xf32>
    %228 = arith.addf %227, %226 : vector<8x128xf32>
    %229 = arith.divf %227, %228 : vector<8x128xf32>
    %230 = vector.extract_strided_slice %229 {offsets = [0, 0], sizes = [8, 32], strides = [1, 1]} : vector<8x128xf32> to vector<8x32xf32>
    %231 = vector.extract_strided_slice %229 {offsets = [0, 32], sizes = [8, 32], strides = [1, 1]} : vector<8x128xf32> to vector<8x32xf32>
    %232 = vector.extract_strided_slice %229 {offsets = [0, 64], sizes = [8, 32], strides = [1, 1]} : vector<8x128xf32> to vector<8x32xf32>
    %cst_50 = arith.constant 2.000000e+00 : f32
    %233 = vector.broadcast %cst_50 : f32 to vector<8x32xf32>
    %234 = arith.mulf %233, %232 : vector<8x32xf32>
    %cst_51 = arith.constant 1.000000e+00 : f32
    %235 = vector.broadcast %cst_51 : f32 to vector<8x32xf32>
    %236 = arith.subf %234, %235 : vector<8x32xf32>
    %237 = vector.extract_strided_slice %229 {offsets = [0, 96], sizes = [8, 32], strides = [1, 1]} : vector<8x128xf32> to vector<8x32xf32>
    %238 = arith.mulf %231, %206 : vector<8x32xf32>
    %239 = arith.mulf %230, %236 : vector<8x32xf32>
    %240 = arith.addf %238, %239 : vector<8x32xf32>
    %241 = math.tanh %240 : vector<8x32xf32>
    %242 = arith.mulf %237, %241 : vector<8x32xf32>
    %243 = arith.truncf %242 : vector<8x32xf32> to vector<8x32xbf16>
    %cst_52 = arith.constant dense<0.000000e+00> : vector<8x128xf32>
    %244 = tpu.matmul %243, %3, %cst_52 {dimension_numbers = #tpu.dot_dimension_numbers<[1], [0], [0], [1], [0, 0, 1, 1], [], []>} : vector<8x32xbf16>, vector<32x128xbf16>, vector<8x128xf32> -> vector<8x128xf32>
    %245 = arith.addf %244, %43 : vector<8x128xf32>
    %246 = vector.extract_strided_slice %245 {offsets = [0, 32], sizes = [8, 2], strides = [1, 1]} : vector<8x128xf32> to vector<8x2xf32>
    %c0_53 = arith.constant 0 : index
    %c8 = arith.constant 8 : index
    %247 = vector.load %arg3[%c0_53, %c8] : memref<8x48xf32, #tpu.memory_space<vmem>>, vector<8x2xf32>
    tpu.vector_store %arg3[%c0_53, %c8], %246 {strides = array<i32>} : memref<8x48xf32, #tpu.memory_space<vmem>>, vector<8x2xf32>,
    %248 = vector.extract_strided_slice %245 {offsets = [0, 0], sizes = [8, 32], strides = [1, 1]} : vector<8x128xf32> to vector<8x32xf32>
    %cst_54 = arith.constant 0.000000e+00 : f32
    %249 = vector.broadcast %cst_54 : f32 to vector<8x32xf32>
    %250 = arith.cmpf ogt, %248, %249 : vector<8x32xf32>
    %cst_55 = arith.constant 0.00999999977 : f32
    %251 = vector.broadcast %cst_55 : f32 to vector<8x32xf32>
    %252 = arith.mulf %251, %248 : vector<8x32xf32>
    %253 = arith.select %250, %248, %252 : vector<8x32xi1>, vector<8x32xf32>
    %254 = tpu.concatenate %253, %242 in 1 : vector<8x32xf32>, vector<8x32xf32> -> vector<8x64xf32>
    %255 = arith.truncf %254 : vector<8x64xf32> to vector<8x64xbf16>
    %cst_56 = arith.constant dense<0.000000e+00> : vector<8x128xf32>
    %256 = tpu.matmul %255, %1, %cst_56 {dimension_numbers = #tpu.dot_dimension_numbers<[1], [0], [0], [1], [0, 0, 1, 1], [], []>} : vector<8x64xbf16>, vector<64x128xbf16>, vector<8x128xf32> -> vector<8x128xf32>
    %257 = vector.broadcast %4 : vector<1x128xf32> to vector<8x128xf32>
    %258 = arith.addf %256, %257 : vector<8x128xf32>
    %259 = arith.negf %258 : vector<8x128xf32>
    %260 = math.exp %259 : vector<8x128xf32>
    %cst_57 = arith.constant 1.000000e+00 : f32
    %261 = vector.broadcast %cst_57 : f32 to vector<8x128xf32>
    %262 = arith.addf %261, %260 : vector<8x128xf32>
    %263 = arith.divf %261, %262 : vector<8x128xf32>
    %264 = vector.extract_strided_slice %263 {offsets = [0, 0], sizes = [8, 32], strides = [1, 1]} : vector<8x128xf32> to vector<8x32xf32>
    %265 = vector.extract_strided_slice %263 {offsets = [0, 32], sizes = [8, 32], strides = [1, 1]} : vector<8x128xf32> to vector<8x32xf32>
    %266 = vector.extract_strided_slice %263 {offsets = [0, 64], sizes = [8, 32], strides = [1, 1]} : vector<8x128xf32> to vector<8x32xf32>
    %cst_58 = arith.constant 2.000000e+00 : f32
    %267 = vector.broadcast %cst_58 : f32 to vector<8x32xf32>
    %268 = arith.mulf %267, %266 : vector<8x32xf32>
    %cst_59 = arith.constant 1.000000e+00 : f32
    %269 = vector.broadcast %cst_59 : f32 to vector<8x32xf32>
    %270 = arith.subf %268, %269 : vector<8x32xf32>
    %271 = vector.extract_strided_slice %263 {offsets = [0, 96], sizes = [8, 32], strides = [1, 1]} : vector<8x128xf32> to vector<8x32xf32>
    %272 = arith.mulf %265, %240 : vector<8x32xf32>
    %273 = arith.mulf %264, %270 : vector<8x32xf32>
    %274 = arith.addf %272, %273 : vector<8x32xf32>
    %275 = math.tanh %274 : vector<8x32xf32>
    %276 = arith.mulf %271, %275 : vector<8x32xf32>
    %277 = arith.truncf %276 : vector<8x32xf32> to vector<8x32xbf16>
    %cst_60 = arith.constant dense<0.000000e+00> : vector<8x128xf32>
    %278 = tpu.matmul %277, %3, %cst_60 {dimension_numbers = #tpu.dot_dimension_numbers<[1], [0], [0], [1], [0, 0, 1, 1], [], []>} : vector<8x32xbf16>, vector<32x128xbf16>, vector<8x128xf32> -> vector<8x128xf32>
    %279 = arith.addf %278, %49 : vector<8x128xf32>
    %280 = vector.extract_strided_slice %279 {offsets = [0, 32], sizes = [8, 2], strides = [1, 1]} : vector<8x128xf32> to vector<8x2xf32>
    %c0_61 = arith.constant 0 : index
    %c10 = arith.constant 10 : index
    %281 = vector.load %arg3[%c0_61, %c10] : memref<8x48xf32, #tpu.memory_space<vmem>>, vector<8x2xf32>
    tpu.vector_store %arg3[%c0_61, %c10], %280 {strides = array<i32>} : memref<8x48xf32, #tpu.memory_space<vmem>>, vector<8x2xf32>,
    %282 = vector.extract_strided_slice %279 {offsets = [0, 0], sizes = [8, 32], strides = [1, 1]} : vector<8x128xf32> to vector<8x32xf32>
    %cst_62 = arith.constant 0.000000e+00 : f32
    %283 = vector.broadcast %cst_62 : f32 to vector<8x32xf32>
    %284 = arith.cmpf ogt, %282, %283 : vector<8x32xf32>
    %cst_63 = arith.constant 0.00999999977 : f32
    %285 = vector.broadcast %cst_63 : f32 to vector<8x32xf32>
    %286 = arith.mulf %285, %282 : vector<8x32xf32>
    %287 = arith.select %284, %282, %286 : vector<8x32xi1>, vector<8x32xf32>
    %288 = tpu.concatenate %287, %276 in 1 : vector<8x32xf32>, vector<8x32xf32> -> vector<8x64xf32>
    %289 = arith.truncf %288 : vector<8x64xf32> to vector<8x64xbf16>
    %cst_64 = arith.constant dense<0.000000e+00> : vector<8x128xf32>
    %290 = tpu.matmul %289, %1, %cst_64 {dimension_numbers = #tpu.dot_dimension_numbers<[1], [0], [0], [1], [0, 0, 1, 1], [], []>} : vector<8x64xbf16>, vector<64x128xbf16>, vector<8x128xf32> -> vector<8x128xf32>
    %291 = vector.broadcast %4 : vector<1x128xf32> to vector<8x128xf32>
    %292 = arith.addf %290, %291 : vector<8x128xf32>
    %293 = arith.negf %292 : vector<8x128xf32>
    %294 = math.exp %293 : vector<8x128xf32>
    %cst_65 = arith.constant 1.000000e+00 : f32
    %295 = vector.broadcast %cst_65 : f32 to vector<8x128xf32>
    %296 = arith.addf %295, %294 : vector<8x128xf32>
    %297 = arith.divf %295, %296 : vector<8x128xf32>
    %298 = vector.extract_strided_slice %297 {offsets = [0, 0], sizes = [8, 32], strides = [1, 1]} : vector<8x128xf32> to vector<8x32xf32>
    %299 = vector.extract_strided_slice %297 {offsets = [0, 32], sizes = [8, 32], strides = [1, 1]} : vector<8x128xf32> to vector<8x32xf32>
    %300 = vector.extract_strided_slice %297 {offsets = [0, 64], sizes = [8, 32], strides = [1, 1]} : vector<8x128xf32> to vector<8x32xf32>
    %cst_66 = arith.constant 2.000000e+00 : f32
    %301 = vector.broadcast %cst_66 : f32 to vector<8x32xf32>
    %302 = arith.mulf %301, %300 : vector<8x32xf32>
    %cst_67 = arith.constant 1.000000e+00 : f32
    %303 = vector.broadcast %cst_67 : f32 to vector<8x32xf32>
    %304 = arith.subf %302, %303 : vector<8x32xf32>
    %305 = vector.extract_strided_slice %297 {offsets = [0, 96], sizes = [8, 32], strides = [1, 1]} : vector<8x128xf32> to vector<8x32xf32>
    %306 = arith.mulf %299, %274 : vector<8x32xf32>
    %307 = arith.mulf %298, %304 : vector<8x32xf32>
    %308 = arith.addf %306, %307 : vector<8x32xf32>
    %309 = math.tanh %308 : vector<8x32xf32>
    %310 = arith.mulf %305, %309 : vector<8x32xf32>
    %311 = arith.truncf %310 : vector<8x32xf32> to vector<8x32xbf16>
    %cst_68 = arith.constant dense<0.000000e+00> : vector<8x128xf32>
    %312 = tpu.matmul %311, %3, %cst_68 {dimension_numbers = #tpu.dot_dimension_numbers<[1], [0], [0], [1], [0, 0, 1, 1], [], []>} : vector<8x32xbf16>, vector<32x128xbf16>, vector<8x128xf32> -> vector<8x128xf32>
    %313 = arith.addf %312, %55 : vector<8x128xf32>
    %314 = vector.extract_strided_slice %313 {offsets = [0, 32], sizes = [8, 2], strides = [1, 1]} : vector<8x128xf32> to vector<8x2xf32>
    %c0_69 = arith.constant 0 : index
    %c12 = arith.constant 12 : index
    %315 = vector.load %arg3[%c0_69, %c12] : memref<8x48xf32, #tpu.memory_space<vmem>>, vector<8x2xf32>
    tpu.vector_store %arg3[%c0_69, %c12], %314 {strides = array<i32>} : memref<8x48xf32, #tpu.memory_space<vmem>>, vector<8x2xf32>,
    %316 = vector.extract_strided_slice %313 {offsets = [0, 0], sizes = [8, 32], strides = [1, 1]} : vector<8x128xf32> to vector<8x32xf32>
    %cst_70 = arith.constant 0.000000e+00 : f32
    %317 = vector.broadcast %cst_70 : f32 to vector<8x32xf32>
    %318 = arith.cmpf ogt, %316, %317 : vector<8x32xf32>
    %cst_71 = arith.constant 0.00999999977 : f32
    %319 = vector.broadcast %cst_71 : f32 to vector<8x32xf32>
    %320 = arith.mulf %319, %316 : vector<8x32xf32>
    %321 = arith.select %318, %316, %320 : vector<8x32xi1>, vector<8x32xf32>
    %322 = tpu.concatenate %321, %310 in 1 : vector<8x32xf32>, vector<8x32xf32> -> vector<8x64xf32>
    %323 = arith.truncf %322 : vector<8x64xf32> to vector<8x64xbf16>
    %cst_72 = arith.constant dense<0.000000e+00> : vector<8x128xf32>
    %324 = tpu.matmul %323, %1, %cst_72 {dimension_numbers = #tpu.dot_dimension_numbers<[1], [0], [0], [1], [0, 0, 1, 1], [], []>} : vector<8x64xbf16>, vector<64x128xbf16>, vector<8x128xf32> -> vector<8x128xf32>
    %325 = vector.broadcast %4 : vector<1x128xf32> to vector<8x128xf32>
    %326 = arith.addf %324, %325 : vector<8x128xf32>
    %327 = arith.negf %326 : vector<8x128xf32>
    %328 = math.exp %327 : vector<8x128xf32>
    %cst_73 = arith.constant 1.000000e+00 : f32
    %329 = vector.broadcast %cst_73 : f32 to vector<8x128xf32>
    %330 = arith.addf %329, %328 : vector<8x128xf32>
    %331 = arith.divf %329, %330 : vector<8x128xf32>
    %332 = vector.extract_strided_slice %331 {offsets = [0, 0], sizes = [8, 32], strides = [1, 1]} : vector<8x128xf32> to vector<8x32xf32>
    %333 = vector.extract_strided_slice %331 {offsets = [0, 32], sizes = [8, 32], strides = [1, 1]} : vector<8x128xf32> to vector<8x32xf32>
    %334 = vector.extract_strided_slice %331 {offsets = [0, 64], sizes = [8, 32], strides = [1, 1]} : vector<8x128xf32> to vector<8x32xf32>
    %cst_74 = arith.constant 2.000000e+00 : f32
    %335 = vector.broadcast %cst_74 : f32 to vector<8x32xf32>
    %336 = arith.mulf %335, %334 : vector<8x32xf32>
    %cst_75 = arith.constant 1.000000e+00 : f32
    %337 = vector.broadcast %cst_75 : f32 to vector<8x32xf32>
    %338 = arith.subf %336, %337 : vector<8x32xf32>
    %339 = vector.extract_strided_slice %331 {offsets = [0, 96], sizes = [8, 32], strides = [1, 1]} : vector<8x128xf32> to vector<8x32xf32>
    %340 = arith.mulf %333, %308 : vector<8x32xf32>
    %341 = arith.mulf %332, %338 : vector<8x32xf32>
    %342 = arith.addf %340, %341 : vector<8x32xf32>
    %343 = math.tanh %342 : vector<8x32xf32>
    %344 = arith.mulf %339, %343 : vector<8x32xf32>
    %345 = arith.truncf %344 : vector<8x32xf32> to vector<8x32xbf16>
    %cst_76 = arith.constant dense<0.000000e+00> : vector<8x128xf32>
    %346 = tpu.matmul %345, %3, %cst_76 {dimension_numbers = #tpu.dot_dimension_numbers<[1], [0], [0], [1], [0, 0, 1, 1], [], []>} : vector<8x32xbf16>, vector<32x128xbf16>, vector<8x128xf32> -> vector<8x128xf32>
    %347 = arith.addf %346, %61 : vector<8x128xf32>
    %348 = vector.extract_strided_slice %347 {offsets = [0, 32], sizes = [8, 2], strides = [1, 1]} : vector<8x128xf32> to vector<8x2xf32>
    %c0_77 = arith.constant 0 : index
    %c14 = arith.constant 14 : index
    %349 = vector.load %arg3[%c0_77, %c14] : memref<8x48xf32, #tpu.memory_space<vmem>>, vector<8x2xf32>
    tpu.vector_store %arg3[%c0_77, %c14], %348 {strides = array<i32>} : memref<8x48xf32, #tpu.memory_space<vmem>>, vector<8x2xf32>,
    %c0_78 = arith.constant 0 : index
    %c16 = arith.constant 16 : index
    %350 = vector.load %arg3[%c0_78, %c16] : memref<8x48xf32, #tpu.memory_space<vmem>>, vector<8x32xf32>
    tpu.vector_store %arg3[%c0_78, %c16], %344 {strides = array<i32>} : memref<8x48xf32, #tpu.memory_space<vmem>>, vector<8x32xf32>,
    return
  }
  func.func @transform_0(%arg0: i32) -> (i32, i32) {
    %c0_i32 = arith.constant 0 : i32
    %c0_i32_0 = arith.constant 0 : i32
    %c0_i32_1 = arith.constant 0 : i32
    return %c0_i32, %c0_i32_0 : i32, i32
  }
  func.func @transform_1(%arg0: i32) -> (i32, i32) {
    %c0_i32 = arith.constant 0 : i32
    %c0_i32_0 = arith.constant 0 : i32
    %c0_i32_1 = arith.constant 0 : i32
    return %c0_i32, %c0_i32_0 : i32, i32
  }
  func.func @transform_2(%arg0: i32) -> (i32, i32) {
    %c0_i32 = arith.constant 0 : i32
    %c0_i32_0 = arith.constant 0 : i32
    %c0_i32_1 = arith.constant 0 : i32
    return %c0_i32, %c0_i32_0 : i32, i32
  }
}

</mosaic_0001>

<llo_original>
// kernel: decoder_forward.1
$region0: #{decoder_forward.1}
  #allocation0 [shape = 'u32[]', space=smem, size = 0x4, offset = 0x4, fixed_abs, tag = 'smem constant byte address 0x4 - core index']
  #allocation1 [shape = 'u32[144,128]{1,0:T(1,128)}', space=vmem, size = 0x12000, scoped, tag = 'internal scratch']
  %s0 = inlined_call_operand.vmem [shape: f32[104,128], index: 0, kind: input, shape index: {}]
  %s1 = inlined_call_operand.vmem [shape: f32[8,74], index: 1, kind: input, shape index: {}]
  %s2 = inlined_call_operand.vmem [shape: f32[8,48], index: 2, kind: output, shape index: {}]
  %s3 = sld [smem:[#allocation0]]
  $region18: #{decoder_forward.1} parent=0
    _
  %s5 = ssub.s32 1, %s3
  %s6 = scalar_select 0, %s5, %s3
  // Predicated region
  $region2: #{decoder_forward.1} parent=0 // pred_check
    _
  $region3: #{decoder_forward.1} parent=0 // pred_check_branch
    %8 = sbr.rel (0) target = $region5
  $region4: #{decoder_forward.1} parent=0 // pred_region
    _
  $region5: #{decoder_forward.1} parent=0 // pred_fallthru
    _
  // Predicated region
  $region6: #{decoder_forward.1} parent=0 // pred_check
    _
  $region7: #{decoder_forward.1} parent=0 // pred_check_branch
    %10 = sbr.rel (0) target = $region9
  $region8: #{decoder_forward.1} parent=0 // pred_region
    _
  $region9: #{decoder_forward.1} parent=0 // pred_fallthru
    _
  %v12 = vld [vmem:[%s0] sm:$0xff]
  %v13 = vld [vmem:[%s0 + $0x8] sm:$0xff]
  %v14 = vld [vmem:[%s0 + $0x10] sm:$0xff]
  %v15 = vld [vmem:[%s0 + $0x18] sm:$0xff]
  %v16 = vld [vmem:[%s0 + $0x20] sm:$0xff]
  %v17 = vld [vmem:[%s0 + $0x28] sm:$0xff]
  %v18 = vld [vmem:[%s0 + $0x30] sm:$0xff]
  %v19 = vld [vmem:[%s0 + $0x38] sm:$0xff]
  %v20 = vpack.c.bf16 %v13, %v12
  %v21 = vpack.c.bf16 %v15, %v14
  %v22 = vpack.c.bf16 %v17, %v16
  %v23 = vpack.c.bf16 %v19, %v18
  %v24 = vld [vmem:[%s0 + $0x40] sm:$0xff]
  %v25 = vld [vmem:[%s0 + $0x48] sm:$0xff]
  %v26 = vld [vmem:[%s0 + $0x50] sm:$0xff]
  %v27 = vld [vmem:[%s0 + $0x58] sm:$0xff]
  %v28 = vpack.c.bf16 %v25, %v24
  %v29 = vpack.c.bf16 %v27, %v26
  %v30 = vld [vmem:[%s0 + $0x60] sm:$0x1]
  %v31 = vld [vmem:[%s0 + $0x61] sm:$0x1]
  %v32 = vld [vmem:[%s0 + $0x62] sm:$0x1]
  %v33 = vld [vmem:[%s0 + $0x63] sm:$0x1]
  %v34 = vld [vmem:[%s0 + $0x64] sm:$0x1]
  %v35 = vld [vmem:[%s0 + $0x65] sm:$0x1]
  %v36 = vld [vmem:[%s1] sm:$0xff]
  %38 = vset.pattern.permute.xlu0 65
  %39 = vperm.xlu0 %38, %v36
  %v40 = vpop.permute.xlu0 %39
  %v42 = vlaneseq
  %v43 = vshrl.u32 %v42, 7
  %v44 = vsub.s32 0, %v43
  %v45 = vrot.slane %v32, %v44
  %v46 = vmul.f32 %v40, %v45
  %v47 = vlaneseq
  %v48 = vshrl.u32 %v47, 7
  %v49 = vsub.s32 0, %v48
  %v50 = vrot.slane %v31, %v49
  %v51 = vadd.f32 %v50, %v46
  %52 = vset.pattern.permute.xlu0 66
  %53 = vperm.xlu0 %52, %v36
  %v54 = vpop.permute.xlu0 %53
  %v56 = vmul.f32 %v54, %v45
  %v57 = vadd.f32 %v50, %v56
  %58 = vset.pattern.permute.xlu0 67
  %59 = vperm.xlu0 %58, %v36
  %v60 = vpop.permute.xlu0 %59
  %v62 = vmul.f32 %v60, %v45
  %v63 = vadd.f32 %v50, %v62
  %64 = vset.pattern.permute.xlu0 68
  %65 = vperm.xlu0 %64, %v36
  %v66 = vpop.permute.xlu0 %65
  %v68 = vmul.f32 %v66, %v45
  %v69 = vadd.f32 %v50, %v68
  %70 = vset.pattern.permute.xlu0 69
  %71 = vperm.xlu0 %70, %v36
  %v72 = vpop.permute.xlu0 %71
  %v74 = vmul.f32 %v72, %v45
  %v75 = vadd.f32 %v50, %v74
  %76 = vset.pattern.permute.xlu0 70
  %77 = vperm.xlu0 %76, %v36
  %v78 = vpop.permute.xlu0 %77
  %v80 = vmul.f32 %v78, %v45
  %v81 = vadd.f32 %v50, %v80
  %82 = vset.pattern.permute.xlu0 71
  %83 = vperm.xlu0 %82, %v36
  %v84 = vpop.permute.xlu0 %83
  %v86 = vmul.f32 %v84, %v45
  %v87 = vadd.f32 %v50, %v86
  %88 = vset.pattern.permute.xlu0 72
  %89 = vperm.xlu0 %88, %v36
  %v90 = vpop.permute.xlu0 %89
  %v92 = vlaneseq
  %v93 = vshrl.u32 %v92, 7
  %v94 = vsub.s32 0, %v93
  %v95 = vrot.slane %v33, %v94
  %v96 = vmul.f32 %v90, %v95
  %97 = vset.pattern.permute.xlu0 73
  %98 = vperm.xlu0 %97, %v36
  %v99 = vpop.permute.xlu0 %98
  %v101 = vlaneseq
  %v102 = vshrl.u32 %v101, 7
  %v103 = vsub.s32 0, %v102
  %v104 = vrot.slane %v34, %v103
  %v105 = vmul.f32 %v99, %v104
  %v106 = vadd.f32 %v96, %v105
  %107 = vset.pattern.permute.xlu0 64
  %108 = vperm.xlu0 %107, %v36
  %v109 = vpop.permute.xlu0 %108
  %v111 = vmul.f32 %v109, %v45
  %v112 = vadd.f32 %v106, %v111
  %v113 = vlaneseq
  %v114 = vshrl.u32 %v113, 7
  %v115 = vsub.s32 0, %v114
  %v116 = vrot.slane %v35, %v115
  %v117 = vadd.f32 %v112, %v116
  %vm118 = vcmp.gt.f32.partialorder %v117, 0.0
  %v119 = vmul.f32 %v117, 0.01
  %v120 = vsel %vm118, %v117, %v119
  %121 = vrot.lane.b32.xlu0 %v36, 32
  %v122 = vpop.permute.xlu0 %121
  %vm124 = vcmask 261120
  %v125 = vsel %vm124, %v120, %v122
  %v126 = vpack.c.bf16 %v125, %v125
  %v127 = vlaneseq
  %v128 = vshrl.u32 %v127, 7
  %v129 = vsub.s32 0, %v128
  %v130 = vrot.slane %v30, %v129
  %vm131 = vcmask 523264
  %v133 = vsel %vm131, %v126, 0
  %135 = vmatprep.subr.bf16.mxu0 0
  %136 = vmatpush1.bf16.msra.mxu0 0
  %137 = vmatprep.subr.bf16.mxu0 0
  %138 = vmatpush1.bf16.msra.mxu0 0
  %139 = vmatprep.subr.bf16.mxu0 0
  %140 = vmatpush1.bf16.msra.mxu0 0
  %141 = vmatprep.subr.bf16.mxu0 0
  %142 = vmatpush1.bf16.msra.mxu0 0
  %143 = vmatprep.subr.bf16.mxu0 0
  %144 = vmatpush1.bf16.msra.mxu0 %v23
  %145 = vmatprep.subr.bf16.mxu0 0
  %146 = vmatpush1.bf16.msra.mxu0 %v22
  %147 = vmatprep.subr.bf16.mxu0 0
  %148 = vmatpush1.bf16.msra.mxu0 %v21
  %149 = vmatprep.subr.bf16.mxu0 0
  %150 = vmatpush1.bf16.msra.mxu0 %v20
  %151 = vmatprep.subr.bf16.mxu0 0
  %152 = vmatpush2.bf16.msra.mxu0 0
  %153 = vmatprep.subr.bf16.mxu0 0
  %154 = vmatpush2.bf16.msra.mxu0 0
  %155 = vmatprep.subr.bf16.mxu0 0
  %156 = vmatpush2.bf16.msra.mxu0 0
  %157 = vmatprep.subr.bf16.mxu0 0
  %158 = vmatpush2.bf16.msra.mxu0 0
  %159 = vmatprep.subr.bf16.mxu0 0
  %160 = vmatpush2.bf16.msra.mxu0 0
  %161 = vmatprep.subr.bf16.mxu0 0
  %162 = vmatpush2.bf16.msra.mxu0 0
  %163 = vmatprep.subr.bf16.mxu0 0
  %164 = vmatpush2.bf16.msra.mxu0 0
  %165 = vmatprep.subr.bf16.mxu0 0
  %166 = vmatpush2.bf16.msra.mxu0 0
  %167 = vmatprep.mubr.bf16.mxu0 0
  %168 = vmatmul.mubr.bf16.gmra.mxu0 %v133
  %v169 = vpop.f32.mrf.mxu0
  %v170 = vadd.f32 %v130, %v169
  %v171 = vpop.f32.mrf.mxu0
  %v172 = vpop.f32.mrf.mxu0
  %v173 = vpop.f32.mrf.mxu0
  %174 = vdwg.mxu0
  %v175 = vxor.u32 %v170, 2147483648
  %v176 = vmul.f32 %v175, 1.442695
  %v177 = vpow.pop %v176
  %v178 = vadd.f32 %v177, 1.0
  %v179 = vrcp.pop %v178
  %v180 = vmul.f32 1.0, %v179
  %v181 = vmul.f32 %v180, 2.0
  %v182 = vsub.f32 %v181, 1.0
  %v183 = vmul.f32 %v180, %v36
  %185 = vrot.lane.b32.xlu0 %v182, 64
  %v186 = vpop.permute.xlu0 %185
  %v188 = vmul.f32 %v180, %v186
  %190 = vrot.lane.b32.xlu0 %v188, 32
  %v191 = vpop.permute.xlu0 %190
  %v193 = vadd.f32 %v183, %v191
  %v194 = vtanh.pop %v193
  %196 = vrot.lane.b32.xlu0 %v194, 64
  %v197 = vpop.permute.xlu0 %196
  %v199 = vmul.f32 %v180, %v197
  %v200 = vpack.c.bf16 %v199, %v199
  %202 = vrot.lane.b32.xlu0 %v200, 32
  %v203 = vpop.permute.xlu0 %202
  %v205 = vsel %vm124, %v203, 0
  %207 = vmatprep.subr.bf16.mxu0 0
  %208 = vmatpush1.bf16.msra.mxu0 0
  %209 = vmatprep.subr.bf16.mxu0 0
  %210 = vmatpush1.bf16.msra.mxu0 0
  %211 = vmatprep.subr.bf16.mxu0 0
  %212 = vmatpush1.bf16.msra.mxu0 0
  %213 = vmatprep.subr.bf16.mxu0 0
  %214 = vmatpush1.bf16.msra.mxu0 0
  %215 = vmatprep.subr.bf16.mxu0 0
  %216 = vmatpush1.bf16.msra.mxu0 0
  %217 = vmatprep.subr.bf16.mxu0 0
  %218 = vmatpush1.bf16.msra.mxu0 0
  %219 = vmatprep.subr.bf16.mxu0 0
  %220 = vmatpush1.bf16.msra.mxu0 %v29
  %221 = vmatprep.subr.bf16.mxu0 0
  %222 = vmatpush1.bf16.msra.mxu0 %v28
  %223 = vmatprep.subr.bf16.mxu0 0
  %224 = vmatpush2.bf16.msra.mxu0 0
  %225 = vmatprep.subr.bf16.mxu0 0
  %226 = vmatpush2.bf16.msra.mxu0 0
  %227 = vmatprep.subr.bf16.mxu0 0
  %228 = vmatpush2.bf16.msra.mxu0 0
  %229 = vmatprep.subr.bf16.mxu0 0
  %230 = vmatpush2.bf16.msra.mxu0 0
  %231 = vmatprep.subr.bf16.mxu0 0
  %232 = vmatpush2.bf16.msra.mxu0 0
  %233 = vmatprep.subr.bf16.mxu0 0
  %234 = vmatpush2.bf16.msra.mxu0 0
  %235 = vmatprep.subr.bf16.mxu0 0
  %236 = vmatpush2.bf16.msra.mxu0 0
  %237 = vmatprep.subr.bf16.mxu0 0
  %238 = vmatpush2.bf16.msra.mxu0 0
  %239 = vmatprep.mubr.bf16.mxu0 0
  %240 = vmatmul.mubr.bf16.gmra.mxu0 %v205
  %v241 = vpop.f32.mrf.mxu0
  %v242 = vadd.f32 %v51, %v241
  %v243 = vpop.f32.mrf.mxu0
  %v244 = vpop.f32.mrf.mxu0
  %v245 = vpop.f32.mrf.mxu0
  %246 = vdwg.mxu0
  %248 = vrot.lane.b32.xlu0 %v242, 96
  %v249 = vpop.permute.xlu0 %248
  %vm251 = vcmask 15360
  %252 = vst.msk [vmem:[%s2] sm:$0xff] %vm251, %v249
  %vm253 = vcmp.gt.f32.partialorder %v242, 0.0
  %v254 = vmul.f32 %v242, 0.01
  %v255 = vsel %vm253, %v242, %v254
  %257 = vrot.lane.b32.xlu0 %v199, 64
  %v258 = vpop.permute.xlu0 %257
  %v260 = vsel %vm124, %v255, %v258
  %v261 = vpack.c.bf16 %v260, %v260
  %v263 = vsel %vm131, %v261, 0
  %265 = vmatprep.subr.bf16.mxu0 0
  %266 = vmatpush1.bf16.msra.mxu0 0
  %267 = vmatprep.subr.bf16.mxu0 0
  %268 = vmatpush1.bf16.msra.mxu0 0
  %269 = vmatprep.subr.bf16.mxu0 0
  %270 = vmatpush1.bf16.msra.mxu0 0
  %271 = vmatprep.subr.bf16.mxu0 0
  %272 = vmatpush1.bf16.msra.mxu0 0
  %273 = vmatprep.subr.bf16.mxu0 0
  %274 = vmatpush1.bf16.msra.mxu0 %v23
  %275 = vmatprep.subr.bf16.mxu0 0
  %276 = vmatpush1.bf16.msra.mxu0 %v22
  %277 = vmatprep.subr.bf16.mxu0 0
  %278 = vmatpush1.bf16.msra.mxu0 %v21
  %279 = vmatprep.subr.bf16.mxu0 0
  %280 = vmatpush1.bf16.msra.mxu0 %v20
  %281 = vmatprep.subr.bf16.mxu0 0
  %282 = vmatpush2.bf16.msra.mxu0 0
  %283 = vmatprep.subr.bf16.mxu0 0
  %284 = vmatpush2.bf16.msra.mxu0 0
  %285 = vmatprep.subr.bf16.mxu0 0
  %286 = vmatpush2.bf16.msra.mxu0 0
  %287 = vmatprep.subr.bf16.mxu0 0
  %288 = vmatpush2.bf16.msra.mxu0 0
  %289 = vmatprep.subr.bf16.mxu0 0
  %290 = vmatpush2.bf16.msra.mxu0 0
  %291 = vmatprep.subr.bf16.mxu0 0
  %292 = vmatpush2.bf16.msra.mxu0 0
  %293 = vmatprep.subr.bf16.mxu0 0
  %294 = vmatpush2.bf16.msra.mxu0 0
  %295 = vmatprep.subr.bf16.mxu0 0
  %296 = vmatpush2.bf16.msra.mxu0 0
  %297 = vmatprep.mubr.bf16.mxu0 0
  %298 = vmatmul.mubr.bf16.gmra.mxu0 %v263
  %v299 = vpop.f32.mrf.mxu0
  %v300 = vadd.f32 %v130, %v299
  %v301 = vpop.f32.mrf.mxu0
  %v302 = vpop.f32.mrf.mxu0
  %v303 = vpop.f32.mrf.mxu0
  %304 = vdwg.mxu0
  %v305 = vxor.u32 %v300, 2147483648
  %v306 = vmul.f32 %v305, 1.442695
  %v307 = vpow.pop %v306
  %v308 = vadd.f32 %v307, 1.0
  %v309 = vrcp.pop %v308
  %v310 = vmul.f32 1.0, %v309
  %v311 = vmul.f32 %v310, 2.0
  %v312 = vsub.f32 %v311, 1.0
  %v313 = vmul.f32 %v310, %v193
  %315 = vrot.lane.b32.xlu0 %v312, 64
  %v316 = vpop.permute.xlu0 %315
  %v318 = vmul.f32 %v310, %v316
  %320 = vrot.lane.b32.xlu0 %v318, 32
  %v321 = vpop.permute.xlu0 %320
  %v323 = vadd.f32 %v313, %v321
  %v324 = vtanh.pop %v323
  %326 = vrot.lane.b32.xlu0 %v324, 64
  %v327 = vpop.permute.xlu0 %326
  %v329 = vmul.f32 %v310, %v327
  %v330 = vpack.c.bf16 %v329, %v329
  %332 = vrot.lane.b32.xlu0 %v330, 32
  %v333 = vpop.permute.xlu0 %332
  %v335 = vsel %vm124, %v333, 0
  %337 = vmatprep.subr.bf16.mxu0 0
  %338 = vmatpush1.bf16.msra.mxu0 0
  %339 = vmatprep.subr.bf16.mxu0 0
  %340 = vmatpush1.bf16.msra.mxu0 0
  %341 = vmatprep.subr.bf16.mxu0 0
  %342 = vmatpush1.bf16.msra.mxu0 0
  %343 = vmatprep.subr.bf16.mxu0 0
  %344 = vmatpush1.bf16.msra.mxu0 0
  %345 = vmatprep.subr.bf16.mxu0 0
  %346 = vmatpush1.bf16.msra.mxu0 0
  %347 = vmatprep.subr.bf16.mxu0 0
  %348 = vmatpush1.bf16.msra.mxu0 0
  %349 = vmatprep.subr.bf16.mxu0 0
  %350 = vmatpush1.bf16.msra.mxu0 %v29
  %351 = vmatprep.subr.bf16.mxu0 0
  %352 = vmatpush1.bf16.msra.mxu0 %v28
  %353 = vmatprep.subr.bf16.mxu0 0
  %354 = vmatpush2.bf16.msra.mxu0 0
  %355 = vmatprep.subr.bf16.mxu0 0
  %356 = vmatpush2.bf16.msra.mxu0 0
  %357 = vmatprep.subr.bf16.mxu0 0
  %358 = vmatpush2.bf16.msra.mxu0 0
  %359 = vmatprep.subr.bf16.mxu0 0
  %360 = vmatpush2.bf16.msra.mxu0 0
  %361 = vmatprep.subr.bf16.mxu0 0
  %362 = vmatpush2.bf16.msra.mxu0 0
  %363 = vmatprep.subr.bf16.mxu0 0
  %364 = vmatpush2.bf16.msra.mxu0 0
  %365 = vmatprep.subr.bf16.mxu0 0
  %366 = vmatpush2.bf16.msra.mxu0 0
  %367 = vmatprep.subr.bf16.mxu0 0
  %368 = vmatpush2.bf16.msra.mxu0 0
  %369 = vmatprep.mubr.bf16.mxu0 0
  %370 = vmatmul.mubr.bf16.gmra.mxu0 %v335
  %v371 = vpop.f32.mrf.mxu0
  %v372 = vadd.f32 %v57, %v371
  %v373 = vpop.f32.mrf.mxu0
  %v374 = vpop.f32.mrf.mxu0
  %v375 = vpop.f32.mrf.mxu0
  %376 = vdwg.mxu0
  %378 = vrot.lane.b32.xlu0 %v372, 98
  %v379 = vpop.permute.xlu0 %378
  %vm381 = vcmask 31760
  %382 = vst.msk [vmem:[%s2] sm:$0xff] %vm381, %v379
  %vm383 = vcmp.gt.f32.partialorder %v372, 0.0
  %v384 = vmul.f32 %v372, 0.01
  %v385 = vsel %vm383, %v372, %v384
  %387 = vrot.lane.b32.xlu0 %v329, 64
  %v388 = vpop.permute.xlu0 %387
  %v390 = vsel %vm124, %v385, %v388
  %v391 = vpack.c.bf16 %v390, %v390
  %v393 = vsel %vm131, %v391, 0
  %395 = vmatprep.subr.bf16.mxu0 0
  %396 = vmatpush1.bf16.msra.mxu0 0
  %397 = vmatprep.subr.bf16.mxu0 0
  %398 = vmatpush1.bf16.msra.mxu0 0
  %399 = vmatprep.subr.bf16.mxu0 0
  %400 = vmatpush1.bf16.msra.mxu0 0
  %401 = vmatprep.subr.bf16.mxu0 0
  %402 = vmatpush1.bf16.msra.mxu0 0
  %403 = vmatprep.subr.bf16.mxu0 0
  %404 = vmatpush1.bf16.msra.mxu0 %v23
  %405 = vmatprep.subr.bf16.mxu0 0
  %406 = vmatpush1.bf16.msra.mxu0 %v22
  %407 = vmatprep.subr.bf16.mxu0 0
  %408 = vmatpush1.bf16.msra.mxu0 %v21
  %409 = vmatprep.subr.bf16.mxu0 0
  %410 = vmatpush1.bf16.msra.mxu0 %v20
  %411 = vmatprep.subr.bf16.mxu0 0
  %412 = vmatpush2.bf16.msra.mxu0 0
  %413 = vmatprep.subr.bf16.mxu0 0
  %414 = vmatpush2.bf16.msra.mxu0 0
  %415 = vmatprep.subr.bf16.mxu0 0
  %416 = vmatpush2.bf16.msra.mxu0 0
  %417 = vmatprep.subr.bf16.mxu0 0
  %418 = vmatpush2.bf16.msra.mxu0 0
  %419 = vmatprep.subr.bf16.mxu0 0
  %420 = vmatpush2.bf16.msra.mxu0 0
  %421 = vmatprep.subr.bf16.mxu0 0
  %422 = vmatpush2.bf16.msra.mxu0 0
  %423 = vmatprep.subr.bf16.mxu0 0
  %424 = vmatpush2.bf16.msra.mxu0 0
  %425 = vmatprep.subr.bf16.mxu0 0
  %426 = vmatpush2.bf16.msra.mxu0 0
  %427 = vmatprep.mubr.bf16.mxu0 0
  %428 = vmatmul.mubr.bf16.gmra.mxu0 %v393
  %v429 = vpop.f32.mrf.mxu0
  %v430 = vadd.f32 %v130, %v429
  %v431 = vpop.f32.mrf.mxu0
  %v432 = vpop.f32.mrf.mxu0
  %v433 = vpop.f32.mrf.mxu0
  %434 = vdwg.mxu0
  %v435 = vxor.u32 %v430, 2147483648
  %v436 = vmul.f32 %v435, 1.442695
  %v437 = vpow.pop %v436
  %v438 = vadd.f32 %v437, 1.0
  %v439 = vrcp.pop %v438
  %v440 = vmul.f32 1.0, %v439
  %v441 = vmul.f32 %v440, 2.0
  %v442 = vsub.f32 %v441, 1.0
  %v443 = vmul.f32 %v440, %v323
  %445 = vrot.lane.b32.xlu0 %v442, 64
  %v446 = vpop.permute.xlu0 %445
  %v448 = vmul.f32 %v440, %v446
  %450 = vrot.lane.b32.xlu0 %v448, 32
  %v451 = vpop.permute.xlu0 %450
  %v453 = vadd.f32 %v443, %v451
  %v454 = vtanh.pop %v453
  %456 = vrot.lane.b32.xlu0 %v454, 64
  %v457 = vpop.permute.xlu0 %456
  %v459 = vmul.f32 %v440, %v457
  %v460 = vpack.c.bf16 %v459, %v459
  %462 = vrot.lane.b32.xlu0 %v460, 32
  %v463 = vpop.permute.xlu0 %462
  %v465 = vsel %vm124, %v463, 0
  %467 = vmatprep.subr.bf16.mxu0 0
  %468 = vmatpush1.bf16.msra.mxu0 0
  %469 = vmatprep.subr.bf16.mxu0 0
  %470 = vmatpush1.bf16.msra.mxu0 0
  %471 = vmatprep.subr.bf16.mxu0 0
  %472 = vmatpush1.bf16.msra.mxu0 0
  %473 = vmatprep.subr.bf16.mxu0 0
  %474 = vmatpush1.bf16.msra.mxu0 0
  %475 = vmatprep.subr.bf16.mxu0 0
  %476 = vmatpush1.bf16.msra.mxu0 0
  %477 = vmatprep.subr.bf16.mxu0 0
  %478 = vmatpush1.bf16.msra.mxu0 0
  %479 = vmatprep.subr.bf16.mxu0 0
  %480 = vmatpush1.bf16.msra.mxu0 %v29
  %481 = vmatprep.subr.bf16.mxu0 0
  %482 = vmatpush1.bf16.msra.mxu0 %v28
  %483 = vmatprep.subr.bf16.mxu0 0
  %484 = vmatpush2.bf16.msra.mxu0 0
  %485 = vmatprep.subr.bf16.mxu0 0
  %486 = vmatpush2.bf16.msra.mxu0 0
  %487 = vmatprep.subr.bf16.mxu0 0
  %488 = vmatpush2.bf16.msra.mxu0 0
  %489 = vmatprep.subr.bf16.mxu0 0
  %490 = vmatpush2.bf16.msra.mxu0 0
  %491 = vmatprep.subr.bf16.mxu0 0
  %492 = vmatpush2.bf16.msra.mxu0 0
  %493 = vmatprep.subr.bf16.mxu0 0
  %494 = vmatpush2.bf16.msra.mxu0 0
  %495 = vmatprep.subr.bf16.mxu0 0
  %496 = vmatpush2.bf16.msra.mxu0 0
  %497 = vmatprep.subr.bf16.mxu0 0
  %498 = vmatpush2.bf16.msra.mxu0 0
  %499 = vmatprep.mubr.bf16.mxu0 0
  %500 = vmatmul.mubr.bf16.gmra.mxu0 %v465
  %v501 = vpop.f32.mrf.mxu0
  %v502 = vadd.f32 %v63, %v501
  %v503 = vpop.f32.mrf.mxu0
  %v504 = vpop.f32.mrf.mxu0
  %v505 = vpop.f32.mrf.mxu0
  %506 = vdwg.mxu0
  %508 = vrot.lane.b32.xlu0 %v502, 100
  %v509 = vpop.permute.xlu0 %508
  %vm511 = vcmask 48160
  %512 = vst.msk [vmem:[%s2] sm:$0xff] %vm511, %v509
  %vm513 = vcmp.gt.f32.partialorder %v502, 0.0
  %v514 = vmul.f32 %v502, 0.01
  %v515 = vsel %vm513, %v502, %v514
  %517 = vrot.lane.b32.xlu0 %v459, 64
  %v518 = vpop.permute.xlu0 %517
  %v520 = vsel %vm124, %v515, %v518
  %v521 = vpack.c.bf16 %v520, %v520
  %v523 = vsel %vm131, %v521, 0
  %525 = vmatprep.subr.bf16.mxu0 0
  %526 = vmatpush1.bf16.msra.mxu0 0
  %527 = vmatprep.subr.bf16.mxu0 0
  %528 = vmatpush1.bf16.msra.mxu0 0
  %529 = vmatprep.subr.bf16.mxu0 0
  %530 = vmatpush1.bf16.msra.mxu0 0
  %531 = vmatprep.subr.bf16.mxu0 0
  %532 = vmatpush1.bf16.msra.mxu0 0
  %533 = vmatprep.subr.bf16.mxu0 0
  %534 = vmatpush1.bf16.msra.mxu0 %v23
  %535 = vmatprep.subr.bf16.mxu0 0
  %536 = vmatpush1.bf16.msra.mxu0 %v22
  %537 = vmatprep.subr.bf16.mxu0 0
  %538 = vmatpush1.bf16.msra.mxu0 %v21
  %539 = vmatprep.subr.bf16.mxu0 0
  %540 = vmatpush1.bf16.msra.mxu0 %v20
  %541 = vmatprep.subr.bf16.mxu0 0
  %542 = vmatpush2.bf16.msra.mxu0 0
  %543 = vmatprep.subr.bf16.mxu0 0
  %544 = vmatpush2.bf16.msra.mxu0 0
  %545 = vmatprep.subr.bf16.mxu0 0
  %546 = vmatpush2.bf16.msra.mxu0 0
  %547 = vmatprep.subr.bf16.mxu0 0
  %548 = vmatpush2.bf16.msra.mxu0 0
  %549 = vmatprep.subr.bf16.mxu0 0
  %550 = vmatpush2.bf16.msra.mxu0 0
  %551 = vmatprep.subr.bf16.mxu0 0
  %552 = vmatpush2.bf16.msra.mxu0 0
  %553 = vmatprep.subr.bf16.mxu0 0
  %554 = vmatpush2.bf16.msra.mxu0 0
  %555 = vmatprep.subr.bf16.mxu0 0
  %556 = vmatpush2.bf16.msra.mxu0 0
  %557 = vmatprep.mubr.bf16.mxu0 0
  %558 = vmatmul.mubr.bf16.gmra.mxu0 %v523
  %v559 = vpop.f32.mrf.mxu0
  %v560 = vadd.f32 %v130, %v559
  %v561 = vpop.f32.mrf.mxu0
  %v562 = vpop.f32.mrf.mxu0
  %v563 = vpop.f32.mrf.mxu0
  %564 = vdwg.mxu0
  %v565 = vxor.u32 %v560, 2147483648
  %v566 = vmul.f32 %v565, 1.442695
  %v567 = vpow.pop %v566
  %v568 = vadd.f32 %v567, 1.0
  %v569 = vrcp.pop %v568
  %v570 = vmul.f32 1.0, %v569
  %v571 = vmul.f32 %v570, 2.0
  %v572 = vsub.f32 %v571, 1.0
  %v573 = vmul.f32 %v570, %v453
  %575 = vrot.lane.b32.xlu0 %v572, 64
  %v576 = vpop.permute.xlu0 %575
  %v578 = vmul.f32 %v570, %v576
  %580 = vrot.lane.b32.xlu0 %v578, 32
  %v581 = vpop.permute.xlu0 %580
  %v583 = vadd.f32 %v573, %v581
  %v584 = vtanh.pop %v583
  %586 = vrot.lane.b32.xlu0 %v584, 64
  %v587 = vpop.permute.xlu0 %586
  %v589 = vmul.f32 %v570, %v587
  %v590 = vpack.c.bf16 %v589, %v589
  %592 = vrot.lane.b32.xlu0 %v590, 32
  %v593 = vpop.permute.xlu0 %592
  %v595 = vsel %vm124, %v593, 0
  %597 = vmatprep.subr.bf16.mxu0 0
  %598 = vmatpush1.bf16.msra.mxu0 0
  %599 = vmatprep.subr.bf16.mxu0 0
  %600 = vmatpush1.bf16.msra.mxu0 0
  %601 = vmatprep.subr.bf16.mxu0 0
  %602 = vmatpush1.bf16.msra.mxu0 0
  %603 = vmatprep.subr.bf16.mxu0 0
  %604 = vmatpush1.bf16.msra.mxu0 0
  %605 = vmatprep.subr.bf16.mxu0 0
  %606 = vmatpush1.bf16.msra.mxu0 0
  %607 = vmatprep.subr.bf16.mxu0 0
  %608 = vmatpush1.bf16.msra.mxu0 0
  %609 = vmatprep.subr.bf16.mxu0 0
  %610 = vmatpush1.bf16.msra.mxu0 %v29
  %611 = vmatprep.subr.bf16.mxu0 0
  %612 = vmatpush1.bf16.msra.mxu0 %v28
  %613 = vmatprep.subr.bf16.mxu0 0
  %614 = vmatpush2.bf16.msra.mxu0 0
  %615 = vmatprep.subr.bf16.mxu0 0
  %616 = vmatpush2.bf16.msra.mxu0 0
  %617 = vmatprep.subr.bf16.mxu0 0
  %618 = vmatpush2.bf16.msra.mxu0 0
  %619 = vmatprep.subr.bf16.mxu0 0
  %620 = vmatpush2.bf16.msra.mxu0 0
  %621 = vmatprep.subr.bf16.mxu0 0
  %622 = vmatpush2.bf16.msra.mxu0 0
  %623 = vmatprep.subr.bf16.mxu0 0
  %624 = vmatpush2.bf16.msra.mxu0 0
  %625 = vmatprep.subr.bf16.mxu0 0
  %626 = vmatpush2.bf16.msra.mxu0 0
  %627 = vmatprep.subr.bf16.mxu0 0
  %628 = vmatpush2.bf16.msra.mxu0 0
  %629 = vmatprep.mubr.bf16.mxu0 0
  %630 = vmatmul.mubr.bf16.gmra.mxu0 %v595
  %v631 = vpop.f32.mrf.mxu0
  %v632 = vadd.f32 %v69, %v631
  %v633 = vpop.f32.mrf.mxu0
  %v634 = vpop.f32.mrf.mxu0
  %v635 = vpop.f32.mrf.mxu0
  %636 = vdwg.mxu0
  %638 = vrot.lane.b32.xlu0 %v632, 102
  %v639 = vpop.permute.xlu0 %638
  %vm641 = vcmask 64560
  %642 = vst.msk [vmem:[%s2] sm:$0xff] %vm641, %v639
  %vm643 = vcmp.gt.f32.partialorder %v632, 0.0
  %v644 = vmul.f32 %v632, 0.01
  %v645 = vsel %vm643, %v632, %v644
  %647 = vrot.lane.b32.xlu0 %v589, 64
  %v648 = vpop.permute.xlu0 %647
  %v650 = vsel %vm124, %v645, %v648
  %v651 = vpack.c.bf16 %v650, %v650
  %v653 = vsel %vm131, %v651, 0
  %655 = vmatprep.subr.bf16.mxu0 0
  %656 = vmatpush1.bf16.msra.mxu0 0
  %657 = vmatprep.subr.bf16.mxu0 0
  %658 = vmatpush1.bf16.msra.mxu0 0
  %659 = vmatprep.subr.bf16.mxu0 0
  %660 = vmatpush1.bf16.msra.mxu0 0
  %661 = vmatprep.subr.bf16.mxu0 0
  %662 = vmatpush1.bf16.msra.mxu0 0
  %663 = vmatprep.subr.bf16.mxu0 0
  %664 = vmatpush1.bf16.msra.mxu0 %v23
  %665 = vmatprep.subr.bf16.mxu0 0
  %666 = vmatpush1.bf16.msra.mxu0 %v22
  %667 = vmatprep.subr.bf16.mxu0 0
  %668 = vmatpush1.bf16.msra.mxu0 %v21
  %669 = vmatprep.subr.bf16.mxu0 0
  %670 = vmatpush1.bf16.msra.mxu0 %v20
  %671 = vmatprep.subr.bf16.mxu0 0
  %672 = vmatpush2.bf16.msra.mxu0 0
  %673 = vmatprep.subr.bf16.mxu0 0
  %674 = vmatpush2.bf16.msra.mxu0 0
  %675 = vmatprep.subr.bf16.mxu0 0
  %676 = vmatpush2.bf16.msra.mxu0 0
  %677 = vmatprep.subr.bf16.mxu0 0
  %678 = vmatpush2.bf16.msra.mxu0 0
  %679 = vmatprep.subr.bf16.mxu0 0
  %680 = vmatpush2.bf16.msra.mxu0 0
  %681 = vmatprep.subr.bf16.mxu0 0
  %682 = vmatpush2.bf16.msra.mxu0 0
  %683 = vmatprep.subr.bf16.mxu0 0
  %684 = vmatpush2.bf16.msra.mxu0 0
  %685 = vmatprep.subr.bf16.mxu0 0
  %686 = vmatpush2.bf16.msra.mxu0 0
  %687 = vmatprep.mubr.bf16.mxu0 0
  %688 = vmatmul.mubr.bf16.gmra.mxu0 %v653
  %v689 = vpop.f32.mrf.mxu0
  %v690 = vadd.f32 %v130, %v689
  %v691 = vpop.f32.mrf.mxu0
  %v692 = vpop.f32.mrf.mxu0
  %v693 = vpop.f32.mrf.mxu0
  %694 = vdwg.mxu0
  %v695 = vxor.u32 %v690, 2147483648
  %v696 = vmul.f32 %v695, 1.442695
  %v697 = vpow.pop %v696
  %v698 = vadd.f32 %v697, 1.0
  %v699 = vrcp.pop %v698
  %v700 = vmul.f32 1.0, %v699
  %v701 = vmul.f32 %v700, 2.0
  %v702 = vsub.f32 %v701, 1.0
  %v703 = vmul.f32 %v700, %v583
  %705 = vrot.lane.b32.xlu0 %v702, 64
  %v706 = vpop.permute.xlu0 %705
  %v708 = vmul.f32 %v700, %v706
  %710 = vrot.lane.b32.xlu0 %v708, 32
  %v711 = vpop.permute.xlu0 %710
  %v713 = vadd.f32 %v703, %v711
  %v714 = vtanh.pop %v713
  %716 = vrot.lane.b32.xlu0 %v714, 64
  %v717 = vpop.permute.xlu0 %716
  %v719 = vmul.f32 %v700, %v717
  %v720 = vpack.c.bf16 %v719, %v719
  %722 = vrot.lane.b32.xlu0 %v720, 32
  %v723 = vpop.permute.xlu0 %722
  %v725 = vsel %vm124, %v723, 0
  %727 = vmatprep.subr.bf16.mxu0 0
  %728 = vmatpush1.bf16.msra.mxu0 0
  %729 = vmatprep.subr.bf16.mxu0 0
  %730 = vmatpush1.bf16.msra.mxu0 0
  %731 = vmatprep.subr.bf16.mxu0 0
  %732 = vmatpush1.bf16.msra.mxu0 0
  %733 = vmatprep.subr.bf16.mxu0 0
  %734 = vmatpush1.bf16.msra.mxu0 0
  %735 = vmatprep.subr.bf16.mxu0 0
  %736 = vmatpush1.bf16.msra.mxu0 0
  %737 = vmatprep.subr.bf16.mxu0 0
  %738 = vmatpush1.bf16.msra.mxu0 0
  %739 = vmatprep.subr.bf16.mxu0 0
  %740 = vmatpush1.bf16.msra.mxu0 %v29
  %741 = vmatprep.subr.bf16.mxu0 0
  %742 = vmatpush1.bf16.msra.mxu0 %v28
  %743 = vmatprep.subr.bf16.mxu0 0
  %744 = vmatpush2.bf16.msra.mxu0 0
  %745 = vmatprep.subr.bf16.mxu0 0
  %746 = vmatpush2.bf16.msra.mxu0 0
  %747 = vmatprep.subr.bf16.mxu0 0
  %748 = vmatpush2.bf16.msra.mxu0 0
  %749 = vmatprep.subr.bf16.mxu0 0
  %750 = vmatpush2.bf16.msra.mxu0 0
  %751 = vmatprep.subr.bf16.mxu0 0
  %752 = vmatpush2.bf16.msra.mxu0 0
  %753 = vmatprep.subr.bf16.mxu0 0
  %754 = vmatpush2.bf16.msra.mxu0 0
  %755 = vmatprep.subr.bf16.mxu0 0
  %756 = vmatpush2.bf16.msra.mxu0 0
  %757 = vmatprep.subr.bf16.mxu0 0
  %758 = vmatpush2.bf16.msra.mxu0 0
  %759 = vmatprep.mubr.bf16.mxu0 0
  %760 = vmatmul.mubr.bf16.gmra.mxu0 %v725
  %v761 = vpop.f32.mrf.mxu0
  %v762 = vadd.f32 %v75, %v761
  %v763 = vpop.f32.mrf.mxu0
  %v764 = vpop.f32.mrf.mxu0
  %v765 = vpop.f32.mrf.mxu0
  %766 = vdwg.mxu0
  %768 = vrot.lane.b32.xlu0 %v762, 104
  %v769 = vpop.permute.xlu0 %768
  %vm771 = vcmask 80960
  %772 = vst.msk [vmem:[%s2] sm:$0xff] %vm771, %v769
  %vm773 = vcmp.gt.f32.partialorder %v762, 0.0
  %v774 = vmul.f32 %v762, 0.01
  %v775 = vsel %vm773, %v762, %v774
  %777 = vrot.lane.b32.xlu0 %v719, 64
  %v778 = vpop.permute.xlu0 %777
  %v780 = vsel %vm124, %v775, %v778
  %v781 = vpack.c.bf16 %v780, %v780
  %v783 = vsel %vm131, %v781, 0
  %785 = vmatprep.subr.bf16.mxu0 0
  %786 = vmatpush1.bf16.msra.mxu0 0
  %787 = vmatprep.subr.bf16.mxu0 0
  %788 = vmatpush1.bf16.msra.mxu0 0
  %789 = vmatprep.subr.bf16.mxu0 0
  %790 = vmatpush1.bf16.msra.mxu0 0
  %791 = vmatprep.subr.bf16.mxu0 0
  %792 = vmatpush1.bf16.msra.mxu0 0
  %793 = vmatprep.subr.bf16.mxu0 0
  %794 = vmatpush1.bf16.msra.mxu0 %v23
  %795 = vmatprep.subr.bf16.mxu0 0
  %796 = vmatpush1.bf16.msra.mxu0 %v22
  %797 = vmatprep.subr.bf16.mxu0 0
  %798 = vmatpush1.bf16.msra.mxu0 %v21
  %799 = vmatprep.subr.bf16.mxu0 0
  %800 = vmatpush1.bf16.msra.mxu0 %v20
  %801 = vmatprep.subr.bf16.mxu0 0
  %802 = vmatpush2.bf16.msra.mxu0 0
  %803 = vmatprep.subr.bf16.mxu0 0
  %804 = vmatpush2.bf16.msra.mxu0 0
  %805 = vmatprep.subr.bf16.mxu0 0
  %806 = vmatpush2.bf16.msra.mxu0 0
  %807 = vmatprep.subr.bf16.mxu0 0
  %808 = vmatpush2.bf16.msra.mxu0 0
  %809 = vmatprep.subr.bf16.mxu0 0
  %810 = vmatpush2.bf16.msra.mxu0 0
  %811 = vmatprep.subr.bf16.mxu0 0
  %812 = vmatpush2.bf16.msra.mxu0 0
  %813 = vmatprep.subr.bf16.mxu0 0
  %814 = vmatpush2.bf16.msra.mxu0 0
  %815 = vmatprep.subr.bf16.mxu0 0
  %816 = vmatpush2.bf16.msra.mxu0 0
  %817 = vmatprep.mubr.bf16.mxu0 0
  %818 = vmatmul.mubr.bf16.gmra.mxu0 %v783
  %v819 = vpop.f32.mrf.mxu0
  %v820 = vadd.f32 %v130, %v819
  %v821 = vpop.f32.mrf.mxu0
  %v822 = vpop.f32.mrf.mxu0
  %v823 = vpop.f32.mrf.mxu0
  %824 = vdwg.mxu0
  %v825 = vxor.u32 %v820, 2147483648
  %v826 = vmul.f32 %v825, 1.442695
  %v827 = vpow.pop %v826
  %v828 = vadd.f32 %v827, 1.0
  %v829 = vrcp.pop %v828
  %v830 = vmul.f32 1.0, %v829
  %v831 = vmul.f32 %v830, 2.0
  %v832 = vsub.f32 %v831, 1.0
  %v833 = vmul.f32 %v830, %v713
  %835 = vrot.lane.b32.xlu0 %v832, 64
  %v836 = vpop.permute.xlu0 %835
  %v838 = vmul.f32 %v830, %v836
  %840 = vrot.lane.b32.xlu0 %v838, 32
  %v841 = vpop.permute.xlu0 %840
  %v843 = vadd.f32 %v833, %v841
  %v844 = vtanh.pop %v843
  %846 = vrot.lane.b32.xlu0 %v844, 64
  %v847 = vpop.permute.xlu0 %846
  %v849 = vmul.f32 %v830, %v847
  %v850 = vpack.c.bf16 %v849, %v849
  %852 = vrot.lane.b32.xlu0 %v850, 32
  %v853 = vpop.permute.xlu0 %852
  %v855 = vsel %vm124, %v853, 0
  %857 = vmatprep.subr.bf16.mxu0 0
  %858 = vmatpush1.bf16.msra.mxu0 0
  %859 = vmatprep.subr.bf16.mxu0 0
  %860 = vmatpush1.bf16.msra.mxu0 0
  %861 = vmatprep.subr.bf16.mxu0 0
  %862 = vmatpush1.bf16.msra.mxu0 0
  %863 = vmatprep.subr.bf16.mxu0 0
  %864 = vmatpush1.bf16.msra.mxu0 0
  %865 = vmatprep.subr.bf16.mxu0 0
  %866 = vmatpush1.bf16.msra.mxu0 0
  %867 = vmatprep.subr.bf16.mxu0 0
  %868 = vmatpush1.bf16.msra.mxu0 0
  %869 = vmatprep.subr.bf16.mxu0 0
  %870 = vmatpush1.bf16.msra.mxu0 %v29
  %871 = vmatprep.subr.bf16.mxu0 0
  %872 = vmatpush1.bf16.msra.mxu0 %v28
  %873 = vmatprep.subr.bf16.mxu0 0
  %874 = vmatpush2.bf16.msra.mxu0 0
  %875 = vmatprep.subr.bf16.mxu0 0
  %876 = vmatpush2.bf16.msra.mxu0 0
  %877 = vmatprep.subr.bf16.mxu0 0
  %878 = vmatpush2.bf16.msra.mxu0 0
  %879 = vmatprep.subr.bf16.mxu0 0
  %880 = vmatpush2.bf16.msra.mxu0 0
  %881 = vmatprep.subr.bf16.mxu0 0
  %882 = vmatpush2.bf16.msra.mxu0 0
  %883 = vmatprep.subr.bf16.mxu0 0
  %884 = vmatpush2.bf16.msra.mxu0 0
  %885 = vmatprep.subr.bf16.mxu0 0
  %886 = vmatpush2.bf16.msra.mxu0 0
  %887 = vmatprep.subr.bf16.mxu0 0
  %888 = vmatpush2.bf16.msra.mxu0 0
  %889 = vmatprep.mubr.bf16.mxu0 0
  %890 = vmatmul.mubr.bf16.gmra.mxu0 %v855
  %v891 = vpop.f32.mrf.mxu0
  %v892 = vadd.f32 %v81, %v891
  %v893 = vpop.f32.mrf.mxu0
  %v894 = vpop.f32.mrf.mxu0
  %v895 = vpop.f32.mrf.mxu0
  %896 = vdwg.mxu0
  %898 = vrot.lane.b32.xlu0 %v892, 106
  %v899 = vpop.permute.xlu0 %898
  %vm901 = vcmask 97360
  %902 = vst.msk [vmem:[%s2] sm:$0xff] %vm901, %v899
  %vm903 = vcmp.gt.f32.partialorder %v892, 0.0
  %v904 = vmul.f32 %v892, 0.01
  %v905 = vsel %vm903, %v892, %v904
  %907 = vrot.lane.b32.xlu0 %v849, 64
  %v908 = vpop.permute.xlu0 %907
  %v910 = vsel %vm124, %v905, %v908
  %v911 = vpack.c.bf16 %v910, %v910
  %v913 = vsel %vm131, %v911, 0
  %915 = vmatprep.subr.bf16.mxu0 0
  %916 = vmatpush1.bf16.msra.mxu0 0
  %917 = vmatprep.subr.bf16.mxu0 0
  %918 = vmatpush1.bf16.msra.mxu0 0
  %919 = vmatprep.subr.bf16.mxu0 0
  %920 = vmatpush1.bf16.msra.mxu0 0
  %921 = vmatprep.subr.bf16.mxu0 0
  %922 = vmatpush1.bf16.msra.mxu0 0
  %923 = vmatprep.subr.bf16.mxu0 0
  %924 = vmatpush1.bf16.msra.mxu0 %v23
  %925 = vmatprep.subr.bf16.mxu0 0
  %926 = vmatpush1.bf16.msra.mxu0 %v22
  %927 = vmatprep.subr.bf16.mxu0 0
  %928 = vmatpush1.bf16.msra.mxu0 %v21
  %929 = vmatprep.subr.bf16.mxu0 0
  %930 = vmatpush1.bf16.msra.mxu0 %v20
  %931 = vmatprep.subr.bf16.mxu0 0
  %932 = vmatpush2.bf16.msra.mxu0 0
  %933 = vmatprep.subr.bf16.mxu0 0
  %934 = vmatpush2.bf16.msra.mxu0 0
  %935 = vmatprep.subr.bf16.mxu0 0
  %936 = vmatpush2.bf16.msra.mxu0 0
  %937 = vmatprep.subr.bf16.mxu0 0
  %938 = vmatpush2.bf16.msra.mxu0 0
  %939 = vmatprep.subr.bf16.mxu0 0
  %940 = vmatpush2.bf16.msra.mxu0 0
  %941 = vmatprep.subr.bf16.mxu0 0
  %942 = vmatpush2.bf16.msra.mxu0 0
  %943 = vmatprep.subr.bf16.mxu0 0
  %944 = vmatpush2.bf16.msra.mxu0 0
  %945 = vmatprep.subr.bf16.mxu0 0
  %946 = vmatpush2.bf16.msra.mxu0 0
  %947 = vmatprep.mubr.bf16.mxu0 0
  %948 = vmatmul.mubr.bf16.gmra.mxu0 %v913
  %v949 = vpop.f32.mrf.mxu0
  %v950 = vadd.f32 %v130, %v949
  %v951 = vpop.f32.mrf.mxu0
  %v952 = vpop.f32.mrf.mxu0
  %v953 = vpop.f32.mrf.mxu0
  %954 = vdwg.mxu0
  %v955 = vxor.u32 %v950, 2147483648
  %v956 = vmul.f32 %v955, 1.442695
  %v957 = vpow.pop %v956
  %v958 = vadd.f32 %v957, 1.0
  %v959 = vrcp.pop %v958
  %v960 = vmul.f32 1.0, %v959
  %v961 = vmul.f32 %v960, 2.0
  %v962 = vsub.f32 %v961, 1.0
  %v963 = vmul.f32 %v960, %v843
  %965 = vrot.lane.b32.xlu0 %v962, 64
  %v966 = vpop.permute.xlu0 %965
  %v968 = vmul.f32 %v960, %v966
  %970 = vrot.lane.b32.xlu0 %v968, 32
  %v971 = vpop.permute.xlu0 %970
  %v973 = vadd.f32 %v963, %v971
  %v974 = vtanh.pop %v973
  %976 = vrot.lane.b32.xlu0 %v974, 64
  %v977 = vpop.permute.xlu0 %976
  %v979 = vmul.f32 %v960, %v977
  %v980 = vpack.c.bf16 %v979, %v979
  %982 = vrot.lane.b32.xlu0 %v980, 32
  %v983 = vpop.permute.xlu0 %982
  %v985 = vsel %vm124, %v983, 0
  %987 = vmatprep.subr.bf16.mxu0 0
  %988 = vmatpush1.bf16.msra.mxu0 0
  %989 = vmatprep.subr.bf16.mxu0 0
  %990 = vmatpush1.bf16.msra.mxu0 0
  %991 = vmatprep.subr.bf16.mxu0 0
  %992 = vmatpush1.bf16.msra.mxu0 0
  %993 = vmatprep.subr.bf16.mxu0 0
  %994 = vmatpush1.bf16.msra.mxu0 0
  %995 = vmatprep.subr.bf16.mxu0 0
  %996 = vmatpush1.bf16.msra.mxu0 0
  %997 = vmatprep.subr.bf16.mxu0 0
  %998 = vmatpush1.bf16.msra.mxu0 0
  %999 = vmatprep.subr.bf16.mxu0 0
  %1000 = vmatpush1.bf16.msra.mxu0 %v29
  %1001 = vmatprep.subr.bf16.mxu0 0
  %1002 = vmatpush1.bf16.msra.mxu0 %v28
  %1003 = vmatprep.subr.bf16.mxu0 0
  %1004 = vmatpush2.bf16.msra.mxu0 0
  %1005 = vmatprep.subr.bf16.mxu0 0
  %1006 = vmatpush2.bf16.msra.mxu0 0
  %1007 = vmatprep.subr.bf16.mxu0 0
  %1008 = vmatpush2.bf16.msra.mxu0 0
  %1009 = vmatprep.subr.bf16.mxu0 0
  %1010 = vmatpush2.bf16.msra.mxu0 0
  %1011 = vmatprep.subr.bf16.mxu0 0
  %1012 = vmatpush2.bf16.msra.mxu0 0
  %1013 = vmatprep.subr.bf16.mxu0 0
  %1014 = vmatpush2.bf16.msra.mxu0 0
  %1015 = vmatprep.subr.bf16.mxu0 0
  %1016 = vmatpush2.bf16.msra.mxu0 0
  %1017 = vmatprep.subr.bf16.mxu0 0
  %1018 = vmatpush2.bf16.msra.mxu0 0
  %1019 = vmatprep.mubr.bf16.mxu0 0
  %1020 = vmatmul.mubr.bf16.gmra.mxu0 %v985
  %v1021 = vpop.f32.mrf.mxu0
  %v1022 = vadd.f32 %v87, %v1021
  %v1023 = vpop.f32.mrf.mxu0
  %v1024 = vpop.f32.mrf.mxu0
  %v1025 = vpop.f32.mrf.mxu0
  %1026 = vdwg.mxu0
  %1028 = vrot.lane.b32.xlu0 %v1022, 108
  %v1029 = vpop.permute.xlu0 %1028
  %vm1031 = vcmask 113760
  %1032 = vst.msk [vmem:[%s2] sm:$0xff] %vm1031, %v1029
  %vm1033 = vcmp.gt.f32.partialorder %v1022, 0.0
  %v1034 = vmul.f32 %v1022, 0.01
  %v1035 = vsel %vm1033, %v1022, %v1034
  %1037 = vrot.lane.b32.xlu0 %v979, 64
  %v1038 = vpop.permute.xlu0 %1037
  %v1040 = vsel %vm124, %v1035, %v1038
  %v1041 = vpack.c.bf16 %v1040, %v1040
  %v1043 = vsel %vm131, %v1041, 0
  %1045 = vmatprep.subr.bf16.mxu0 0
  %1046 = vmatpush1.bf16.msra.mxu0 0
  %1047 = vmatprep.subr.bf16.mxu0 0
  %1048 = vmatpush1.bf16.msra.mxu0 0
  %1049 = vmatprep.subr.bf16.mxu0 0
  %1050 = vmatpush1.bf16.msra.mxu0 0
  %1051 = vmatprep.subr.bf16.mxu0 0
  %1052 = vmatpush1.bf16.msra.mxu0 0
  %1053 = vmatprep.subr.bf16.mxu0 0
  %1054 = vmatpush1.bf16.msra.mxu0 %v23
  %1055 = vmatprep.subr.bf16.mxu0 0
  %1056 = vmatpush1.bf16.msra.mxu0 %v22
  %1057 = vmatprep.subr.bf16.mxu0 0
  %1058 = vmatpush1.bf16.msra.mxu0 %v21
  %1059 = vmatprep.subr.bf16.mxu0 0
  %1060 = vmatpush1.bf16.msra.mxu0 %v20
  %1061 = vmatprep.subr.bf16.mxu0 0
  %1062 = vmatpush2.bf16.msra.mxu0 0
  %1063 = vmatprep.subr.bf16.mxu0 0
  %1064 = vmatpush2.bf16.msra.mxu0 0
  %1065 = vmatprep.subr.bf16.mxu0 0
  %1066 = vmatpush2.bf16.msra.mxu0 0
  %1067 = vmatprep.subr.bf16.mxu0 0
  %1068 = vmatpush2.bf16.msra.mxu0 0
  %1069 = vmatprep.subr.bf16.mxu0 0
  %1070 = vmatpush2.bf16.msra.mxu0 0
  %1071 = vmatprep.subr.bf16.mxu0 0
  %1072 = vmatpush2.bf16.msra.mxu0 0
  %1073 = vmatprep.subr.bf16.mxu0 0
  %1074 = vmatpush2.bf16.msra.mxu0 0
  %1075 = vmatprep.subr.bf16.mxu0 0
  %1076 = vmatpush2.bf16.msra.mxu0 0
  %1077 = vmatprep.mubr.bf16.mxu0 0
  %1078 = vmatmul.mubr.bf16.gmra.mxu0 %v1043
  %v1079 = vpop.f32.mrf.mxu0
  %v1080 = vadd.f32 %v130, %v1079
  %v1081 = vpop.f32.mrf.mxu0
  %v1082 = vpop.f32.mrf.mxu0
  %v1083 = vpop.f32.mrf.mxu0
  %1084 = vdwg.mxu0
  %v1085 = vxor.u32 %v1080, 2147483648
  %v1086 = vmul.f32 %v1085, 1.442695
  %v1087 = vpow.pop %v1086
  %v1088 = vadd.f32 %v1087, 1.0
  %v1089 = vrcp.pop %v1088
  %v1090 = vmul.f32 1.0, %v1089
  %v1091 = vmul.f32 %v1090, 2.0
  %v1092 = vsub.f32 %v1091, 1.0
  %v1093 = vmul.f32 %v1090, %v973
  %1095 = vrot.lane.b32.xlu0 %v1092, 64
  %v1096 = vpop.permute.xlu0 %1095
  %v1098 = vmul.f32 %v1090, %v1096
  %1100 = vrot.lane.b32.xlu0 %v1098, 32
  %v1101 = vpop.permute.xlu0 %1100
  %v1103 = vadd.f32 %v1093, %v1101
  %v1104 = vtanh.pop %v1103
  %1106 = vrot.lane.b32.xlu0 %v1104, 64
  %v1107 = vpop.permute.xlu0 %1106
  %v1109 = vmul.f32 %v1090, %v1107
  %v1110 = vpack.c.bf16 %v1109, %v1109
  %1112 = vrot.lane.b32.xlu0 %v1110, 32
  %v1113 = vpop.permute.xlu0 %1112
  %v1115 = vsel %vm124, %v1113, 0
  %1117 = vmatprep.subr.bf16.mxu0 0
  %1118 = vmatpush1.bf16.msra.mxu0 0
  %1119 = vmatprep.subr.bf16.mxu0 0
  %1120 = vmatpush1.bf16.msra.mxu0 0
  %1121 = vmatprep.subr.bf16.mxu0 0
  %1122 = vmatpush1.bf16.msra.mxu0 0
  %1123 = vmatprep.subr.bf16.mxu0 0
  %1124 = vmatpush1.bf16.msra.mxu0 0
  %1125 = vmatprep.subr.bf16.mxu0 0
  %1126 = vmatpush1.bf16.msra.mxu0 0
  %1127 = vmatprep.subr.bf16.mxu0 0
  %1128 = vmatpush1.bf16.msra.mxu0 0
  %1129 = vmatprep.subr.bf16.mxu0 0
  %1130 = vmatpush1.bf16.msra.mxu0 %v29
  %1131 = vmatprep.subr.bf16.mxu0 0
  %1132 = vmatpush1.bf16.msra.mxu0 %v28
  %1133 = vmatprep.subr.bf16.mxu0 0
  %1134 = vmatpush2.bf16.msra.mxu0 0
  %1135 = vmatprep.subr.bf16.mxu0 0
  %1136 = vmatpush2.bf16.msra.mxu0 0
  %1137 = vmatprep.subr.bf16.mxu0 0
  %1138 = vmatpush2.bf16.msra.mxu0 0
  %1139 = vmatprep.subr.bf16.mxu0 0
  %1140 = vmatpush2.bf16.msra.mxu0 0
  %1141 = vmatprep.subr.bf16.mxu0 0
  %1142 = vmatpush2.bf16.msra.mxu0 0
  %1143 = vmatprep.subr.bf16.mxu0 0
  %1144 = vmatpush2.bf16.msra.mxu0 0
  %1145 = vmatprep.subr.bf16.mxu0 0
  %1146 = vmatpush2.bf16.msra.mxu0 0
  %1147 = vmatprep.subr.bf16.mxu0 0
  %1148 = vmatpush2.bf16.msra.mxu0 0
  %1149 = vmatprep.mubr.bf16.mxu0 0
  %1150 = vmatmul.mubr.bf16.gmra.mxu0 %v1115
  %v1151 = vpop.f32.mrf.mxu0
  %v1152 = vadd.f32 %v87, %v1151
  %v1153 = vpop.f32.mrf.mxu0
  %v1154 = vpop.f32.mrf.mxu0
  %v1155 = vpop.f32.mrf.mxu0
  %1156 = vdwg.mxu0
  %1158 = vrot.lane.b32.xlu0 %v1152, 110
  %v1159 = vpop.permute.xlu0 %1158
  %vm1161 = vcmask 130160
  %1162 = vst.msk [vmem:[%s2] sm:$0xff] %vm1161, %v1159
  %1164 = vrot.lane.b32.xlu0 %v1109, 48
  %v1165 = vpop.permute.xlu0 %1164
  %vm1167 = vcmask 392320
  %1168 = vst.msk [vmem:[%s2] sm:$0xff] %vm1167, %v1165
  // Predicated region
  $region10: #{decoder_forward.1} parent=0 // pred_check
    _
  $region11: #{decoder_forward.1} parent=0 // pred_check_branch
    %1170 = sbr.rel (0) target = $region13
  $region12: #{decoder_forward.1} parent=0 // pred_region
    _
  $region13: #{decoder_forward.1} parent=0 // pred_fallthru
    _
  // Predicated region
  $region14: #{decoder_forward.1} parent=0 // pred_check
    _
  $region15: #{decoder_forward.1} parent=0 // pred_check_branch
    %1172 = sbr.rel (0) target = $region17
  $region16: #{decoder_forward.1} parent=0 // pred_region
    _
  $region17: #{decoder_forward.1} parent=0 // pred_fallthru
    _

</llo_original>
